<compile_context>
chip_gen: v5e
topology: v5e:2x2
jax: 0.10.0
libtpu: 0.0.40
codegen_flags: <defaults>
</compile_context>

<pallas_src>
import functools

import jax
import jax.numpy as jnp
from jax.experimental import pallas as pl
from jax.experimental.pallas import tpu as pltpu


# ----------------------------------------------------------------------------
# Hardware-aware sizing
# ----------------------------------------------------------------------------
def _round_up(x, m):
    return ((x + m - 1) // m) * m


def _tpu_vmem_capacity_bytes():
    try:
        info = pltpu.get_tpu_info()
        return int(getattr(info, "vmem_capacity_bytes", 128 << 20))
    except Exception:
        return 128 << 20


_VMEM_CAP = _tpu_vmem_capacity_bytes()
# 256-row tiles on 128 MiB-VMEM chips (v5e/v6e); 128 on v7x (64 MiB per TC).
_PREFERRED_ROWS = 256 if _VMEM_CAP >= (96 << 20) else 128
_VMEM_LIMIT = int(min(64 << 20, _VMEM_CAP // 2))


def _row_tile(n):
    return n if n <= _PREFERRED_ROWS else _PREFERRED_ROWS


# ----------------------------------------------------------------------------
# Kernels
# ----------------------------------------------------------------------------
def _expand_qkvg_kernel(x_ref, we_ref, be_ref, wq_ref, bq_ref, o_ref):
    """Fused expand_adapter + {QKV, gate} projections for one row tile.

    x:(TM,C) f32, We:(C,E) bf16, Wq:(E,W) bf16 where the W = round_up(3E+2,128)
    columns are [q*scale | k | v | forget | update | zero-pad].  x_e stays in
    VMEM; output is bf16 (it is only ever consumed as a bf16 MXU operand).
    """
    x = x_ref[...].astype(jnp.bfloat16)
    xe = jnp.dot(x, we_ref[...], preferred_element_type=jnp.float32) + be_ref[...]
    xe = jnp.maximum(xe, 0.0)                                  # expand ReLU
    qkvg = jnp.dot(xe.astype(jnp.bfloat16), wq_ref[...],
                   preferred_element_type=jnp.float32) + bq_ref[...]
    o_ref[...] = qkvg.astype(o_ref.dtype)


def _attn_tail_kernel(qkvg_ref, wo_ref, bo_ref, ws_ref, bs_ref, o_ref,
                      *, num_heads, head_dim):
    """Per-batch: all-head attention + out_proj + gates + shrink_adapter.

    qkvg_ref: (T, W) bf16 packed [q|k|v|f|u|pad] for one batch element.
    o_ref:    (T, Cpad) f32 — lane-dense store; pad columns come from
              zero-padded Ws columns and are sliced off on the host.
    """
    e = num_heads * head_dim
    t = qkvg_ref.shape[0]
    qkvg = qkvg_ref[...]

    def heads(lo):  # (T, E) slice -> (H, T, D), head-major for batched einsums
        return jnp.transpose(
            qkvg[:, lo:lo + e].reshape(t, num_heads, head_dim), (1, 0, 2))

    q = heads(0)            # q pre-scaled by head_dim**-0.5 at init
    k = heads(e)
    v = heads(2 * e)

    # TODO(synk): flash-style KV-tiled online softmax before scaling T; full
    # (H,T,T) f32 scores are fine at moderate sequence lengths.
    s = jnp.einsum("htd,hsd->hts", q, k, preferred_element_type=jnp.float32)
    s = s - jnp.max(s, axis=-1, keepdims=True)
    p = jnp.exp(s)
    # Approx reciprocal rides the EUP slot; use exact division for strict
    # parity checks against the f32 PyTorch reference.
    p = p * pl.reciprocal(jnp.sum(p, axis=-1, keepdims=True), approx=True)
    o = jnp.einsum("hts,hsd->htd", p.astype(jnp.bfloat16), v,
                   preferred_element_type=jnp.float32)             # (H,T,D)
    attn = jnp.transpose(o, (1, 0, 2)).reshape(t, e).astype(jnp.bfloat16)

    a = jnp.dot(attn, wo_ref[...], preferred_element_type=jnp.float32) + bo_ref[...]

    glog = qkvg[:, 3 * e:3 * e + 2].astype(jnp.float32)             # (T, 2)
    f = jax.nn.sigmoid(glog[:, 0:1])                                # forget
    u = jax.nn.sigmoid(glog[:, 1:2])                                # update
    gated = a * (2.0 + u - f)                                       # a + u*a + (1-f)*a

    y = jnp.dot(gated.astype(jnp.bfloat16), ws_ref[...],
                preferred_element_type=jnp.float32) + bs_ref[...]
    o_ref[...] = jnp.maximum(y, 0.0).astype(o_ref.dtype)            # shrink ReLU


# ----------------------------------------------------------------------------
# pallas_call wrappers
# ----------------------------------------------------------------------------
def pallas_expand_qkvg(x, params):
    """(N, C) f32 -> (N, W) bf16 packed [q|k|v|gates|pad]."""
    n, c = x.shape
    e = params["we"].shape[1]
    w = params["w_qkvg"].shape[1]
    tm = _row_tile(n)
    grid = (pl.cdiv(n, tm),)   # rows are independent; a padded tail block is harmless
    return pl.pallas_call(
        _expand_qkvg_kernel,
        out_shape=jax.ShapeDtypeStruct((n, w), jnp.bfloat16),
        grid=grid,
        in_specs=[
            pl.BlockSpec((tm, c), lambda i: (i, 0)),
            # TODO(synk): at production dims, single-buffer the resident weights
            # (pipeline_mode=pl.Buffered(1) or one-shot scratch copy) to halve
            # their VMEM footprint.
            pl.BlockSpec((c, e), lambda i: (0, 0)),
            pl.BlockSpec((1, e), lambda i: (0, 0)),
            pl.BlockSpec((e, w), lambda i: (0, 0)),
            pl.BlockSpec((1, w), lambda i: (0, 0)),
        ],
        out_specs=pl.BlockSpec((tm, w), lambda i: (i, 0)),
        compiler_params=pltpu.CompilerParams(
            dimension_semantics=("parallel",),
            vmem_limit_bytes=_VMEM_LIMIT),
    )(x, params["we"], params["be"], params["w_qkvg"], params["b_qkvg"])


def pallas_attn_tail(qkvg_tb, params, batch, seq, num_heads):
    """qkvg_tb: (T, B*W) bf16 view -> (T, B*Cpad) f32 (per-batch column windows)."""
    w = params["w_qkvg"].shape[1]
    e = params["we"].shape[1]
    c_pad = params["ws"].shape[1]
    d = e // num_heads
    kern = functools.partial(_attn_tail_kernel, num_heads=num_heads, head_dim=d)
    # TODO(synk): for B == 1 on megacore chips, also grid over q-row tiles so
    # both TensorCores get work.
    return pl.pallas_call(
        kern,
        out_shape=jax.ShapeDtypeStruct((seq, batch * c_pad), jnp.float32),
        grid=(batch,),
        in_specs=[
            pl.BlockSpec((seq, w), lambda b: (0, b)),      # this batch's qkv+gates
            pl.BlockSpec((e, e), lambda b: (0, 0)),        # w_out   (resident)
            pl.BlockSpec((1, e), lambda b: (0, 0)),        # b_out
            pl.BlockSpec((e, c_pad), lambda b: (0, 0)),    # ws (column-padded)
            pl.BlockSpec((1, c_pad), lambda b: (0, 0)),    # bs
        ],
        out_specs=pl.BlockSpec((seq, c_pad), lambda b: (0, b)),
        compiler_params=pltpu.CompilerParams(
            dimension_semantics=("parallel",),
            vmem_limit_bytes=_VMEM_LIMIT),
    )(qkvg_tb, params["w_out"], params["b_out"], params["ws"], params["bs"])


# ----------------------------------------------------------------------------
# Parameter init (deterministic, matches the PyTorch module's init scheme;
# MXU-side weights stored bf16)
# ----------------------------------------------------------------------------
def _xavier(key, fan_in, fan_out, gain=1.0):
    bound = gain * (6.0 / (fan_in + fan_out)) ** 0.5
    # stored as (fan_in, fan_out), i.e. already transposed for x @ W
    return jax.random.uniform(key, (fan_in, fan_out), jnp.float32, -bound, bound)


def _linear_bias(key, fan_in, size):
    bound = 1.0 / (fan_in ** 0.5)
    return jax.random.uniform(key, (1, size), jnp.float32, -bound, bound)


def init_params(key, input_size, num_heads):
    c = input_size
    e = 2 * c
    d = e // num_heads
    scaling = d ** -0.5
    w_cols = _round_up(3 * e + 2, 128)      # [q|k|v|forget|update|zero-pad]
    c_pad = _round_up(c, 128)               # lane-dense tail output

    keys = jax.random.split(key, 13)
    bf16 = jnp.bfloat16
    p = {}

    # expand_adapter: Linear(C, E) + ReLU
    p["we"] = _xavier(keys[0], c, e).astype(bf16)
    p["be"] = _linear_bias(keys[1], c, e)

    # fairseq MultiheadAttention in_proj (E -> 3E); q-scaling folded into q cols.
    gain = 1.0 / (2.0 ** 0.5)
    wq = _xavier(keys[2], e, e, gain) * scaling
    wk = _xavier(keys[3], e, e, gain)
    wv = _xavier(keys[4], e, e, gain)
    b_in = _linear_bias(keys[5], e, 3 * e)
    b_in = b_in.at[:, :e].multiply(scaling)

    # gates: Linear(E, 1) + Sigmoid each, packed as two extra columns riding
    # the QKV matmul (same x_e input), rest zero-padded to a 128 multiple.
    wf = _xavier(keys[6], e, 1)
    bfb = _linear_bias(keys[7], e, 1)
    wu = _xavier(keys[8], e, 1)
    bub = _linear_bias(keys[9], e, 1)

    w_qkvg = jnp.zeros((e, w_cols), jnp.float32)
    w_qkvg = w_qkvg.at[:, :3 * e].set(jnp.concatenate([wq, wk, wv], axis=1))
    w_qkvg = w_qkvg.at[:, 3 * e:3 * e + 1].set(wf)
    w_qkvg = w_qkvg.at[:, 3 * e + 1:3 * e + 2].set(wu)
    b_qkvg = jnp.zeros((1, w_cols), jnp.float32)
    b_qkvg = b_qkvg.at[:, :3 * e].set(b_in)
    b_qkvg = b_qkvg.at[:, 3 * e:3 * e + 1].set(bfb)
    b_qkvg = b_qkvg.at[:, 3 * e + 1:3 * e + 2].set(bub)
    p["w_qkvg"] = w_qkvg.astype(bf16)
    p["b_qkvg"] = b_qkvg

    # out_proj (E -> E); fairseq zero-inits its bias.
    p["w_out"] = _xavier(keys[10], e, e).astype(bf16)
    p["b_out"] = jnp.zeros((1, e), jnp.float32)

    # shrink_adapter: Linear(E, C) + ReLU, columns zero-padded to Cpad so the
    # tail's output store is lane-dense (pad sliced off on host; free when
    # C % 128 == 0).
    ws = _xavier(keys[11], e, c)
    bs = _linear_bias(keys[12], e, c)
    p["ws"] = jnp.zeros((e, c_pad), jnp.float32).at[:, :c].set(ws).astype(bf16)
    p["bs"] = jnp.zeros((1, c_pad), jnp.float32).at[:, :c].set(bs)
    return p


# ----------------------------------------------------------------------------
# Forward pass
# ----------------------------------------------------------------------------
def moyu_attn_layer(params, x, num_heads):
    """x: (T, B, C) float32 -> (T, B, C) float32."""
    t, b, c = x.shape
    w = params["w_qkvg"].shape[1]
    c_pad = params["ws"].shape[1]
    n = t * b

    # Stage 1: row-tiled fused expand_adapter + {QKV, gate} projection.
    # (T,B,C) -> (N,C) is a free, time-major reshape (rows are independent).
    qkvg = pallas_expand_qkvg(x.reshape(n, c), params)             # (N, W) bf16

    # Stage 2: per-batch attention + out_proj + gates + shrink_adapter.
    # (N,W) == (T,B,W) == (T, B*W): batch b's data is the lane-dense (T, W)
    # column window at offset b*W (W % 128 == 0) -> no host transpose needed.
    out = pallas_attn_tail(qkvg.reshape(t, b * w), params, b, t, num_heads)

    # (T, B*Cpad) -> (T, B, Cpad) -> drop zero pad.  Free when C % 128 == 0.
    return out.reshape(t, b, c_pad)[:, :, :c]


# ----------------------------------------------------------------------------
if __name__ == "__main__":
    # TODO(synk): no key_padding_mask / attention dropout path (unmasked
    # inference semantics of the fairseq MultiheadAttention call).
    T, B, C = 8, 2, 32           # seq, batch, input_size (expand_size = 64)
    NUM_HEADS = 4                # args.encoder_attention_heads

    key = jax.random.PRNGKey(0)
    k_param, k_x = jax.random.split(key)
    params = init_params(k_param, C, NUM_HEADS)
    x = jax.random.normal(k_x, (T, B, C), jnp.float32)

    fwd = jax.jit(functools.partial(moyu_attn_layer, num_heads=NUM_HEADS))
    out = fwd(params, x)
    jax.block_until_ready(out)
    assert out.shape == (T, B, C), out.shape
    print("KERNEL_OK")
</pallas_src>

<mosaic_0001>
module attributes {stable_mosaic.version = 11 : i64} {
  func.func @_attn_tail_kernel(%arg0: i32, %arg1: memref<8x256xbf16, #tpu.memory_space<vmem>>, %arg2: memref<64x64xbf16, #tpu.memory_space<vmem>>, %arg3: memref<1x64xf32, #tpu.memory_space<vmem>>, %arg4: memref<64x128xbf16, #tpu.memory_space<vmem>>, %arg5: memref<1x128xf32, #tpu.memory_space<vmem>>, %arg6: memref<8x128xf32, #tpu.memory_space<vmem>>) attributes {dimension_semantics = [#tpu.dimension_semantics<parallel>], iteration_bounds = array<i64: 2>, scalar_prefetch = 0 : i64, scratch_operands = 0 : i64, tpu.core_type = #tpu.core_type<tc>, window_params = [{transform_indices = @transform_0, window_bounds = array<i64: 8, 256>}, {pipeline_mode = #tpu.pipeline_mode<synchronous>, transform_indices = @transform_1, window_bounds = array<i64: 64, 64>}, {pipeline_mode = #tpu.pipeline_mode<synchronous>, transform_indices = @transform_2, window_bounds = array<i64: 1, 64>}, {pipeline_mode = #tpu.pipeline_mode<synchronous>, transform_indices = @transform_3, window_bounds = array<i64: 64, 128>}, {pipeline_mode = #tpu.pipeline_mode<synchronous>, transform_indices = @transform_4, window_bounds = array<i64: 1, 128>}, {transform_indices = @transform_5, window_bounds = array<i64: 8, 128>}]} {
    %c0 = arith.constant 0 : index
    %c0_0 = arith.constant 0 : index
    %0 = vector.load %arg1[%c0, %c0_0] : memref<8x256xbf16, #tpu.memory_space<vmem>>, vector<8x256xbf16>
    %1 = vector.extract_strided_slice %0 {offsets = [0, 0], sizes = [8, 64], strides = [1, 1]} : vector<8x256xbf16> to vector<8x64xbf16>
    %2 = vector.shape_cast %1 : vector<8x64xbf16> to vector<8x4x16xbf16>
    %3 = tpu.transpose %2, [1, 0, 2] : vector<8x4x16xbf16> -> vector<4x8x16xbf16>
    %4 = vector.extract_strided_slice %0 {offsets = [0, 64], sizes = [8, 64], strides = [1, 1]} : vector<8x256xbf16> to vector<8x64xbf16>
    %5 = vector.shape_cast %4 : vector<8x64xbf16> to vector<8x4x16xbf16>
    %6 = tpu.transpose %5, [1, 0, 2] : vector<8x4x16xbf16> -> vector<4x8x16xbf16>
    %7 = vector.extract_strided_slice %0 {offsets = [0, 128], sizes = [8, 64], strides = [1, 1]} : vector<8x256xbf16> to vector<8x64xbf16>
    %8 = vector.shape_cast %7 : vector<8x64xbf16> to vector<8x4x16xbf16>
    %9 = tpu.transpose %8, [1, 0, 2] : vector<8x4x16xbf16> -> vector<4x8x16xbf16>
    "tpu.trace_start"() <{level = 10 : i32, message = "htd,hsd->hts"}> : () -> ()
    %cst = arith.constant dense<0.000000e+00> : vector<4x8x8xf32>
    %10 = tpu.matmul %3, %6, %cst {dimension_numbers = #tpu.dot_dimension_numbers<[2], [2], [1], [1], [0, 0, 0, 1, 1, 1], [0], [0]>} : vector<4x8x16xbf16>, vector<4x8x16xbf16>, vector<4x8x8xf32> -> vector<4x8x8xf32>
    "tpu.trace_stop"() : () -> ()
    %cst_1 = arith.constant dense<0xFF800000> : vector<4x8xf32>
    %11 = vector.multi_reduction <maximumf>, %10, %cst_1 [2] : vector<4x8x8xf32> to vector<4x8xf32>
    %12 = vector.shape_cast %11 : vector<4x8xf32> to vector<4x8x1xf32>
    %13 = vector.broadcast %12 : vector<4x8x1xf32> to vector<4x8x8xf32>
    %14 = arith.subf %10, %13 : vector<4x8x8xf32>
    %15 = math.exp %14 : vector<4x8x8xf32>
    %cst_2 = arith.constant dense<0.000000e+00> : vector<4x8xf32>
    %16 = vector.multi_reduction <add>, %15, %cst_2 [2] : vector<4x8x8xf32> to vector<4x8xf32>
    %17 = vector.shape_cast %16 : vector<4x8xf32> to vector<4x8x1xf32>
    %18 = tpu.reciprocal %17 {approx = true} : vector<4x8x1xf32> -> vector<4x8x1xf32>
    %19 = vector.broadcast %18 : vector<4x8x1xf32> to vector<4x8x8xf32>
    %20 = arith.mulf %15, %19 : vector<4x8x8xf32>
    %21 = arith.truncf %20 : vector<4x8x8xf32> to vector<4x8x8xbf16>
    "tpu.trace_start"() <{level = 10 : i32, message = "hts,hsd->htd"}> : () -> ()
    %cst_3 = arith.constant dense<0.000000e+00> : vector<4x8x16xf32>
    %22 = tpu.matmul %21, %9, %cst_3 {dimension_numbers = #tpu.dot_dimension_numbers<[2], [1], [1], [2], [0, 0, 0, 1, 1, 2], [0], [0]>} : vector<4x8x8xbf16>, vector<4x8x16xbf16>, vector<4x8x16xf32> -> vector<4x8x16xf32>
    "tpu.trace_stop"() : () -> ()
    %23 = tpu.transpose %22, [1, 0, 2] : vector<4x8x16xf32> -> vector<8x4x16xf32>
    %24 = vector.shape_cast %23 : vector<8x4x16xf32> to vector<8x64xf32>
    %25 = arith.truncf %24 : vector<8x64xf32> to vector<8x64xbf16>
    %c0_4 = arith.constant 0 : index
    %c0_5 = arith.constant 0 : index
    %26 = vector.load %arg2[%c0_4, %c0_5] : memref<64x64xbf16, #tpu.memory_space<vmem>>, vector<64x64xbf16>
    %cst_6 = arith.constant dense<0.000000e+00> : vector<8x64xf32>
    %27 = tpu.matmul %25, %26, %cst_6 {dimension_numbers = #tpu.dot_dimension_numbers<[1], [0], [0], [1], [0, 0, 1, 1], [], []>} : vector<8x64xbf16>, vector<64x64xbf16>, vector<8x64xf32> -> vector<8x64xf32>
    %c0_7 = arith.constant 0 : index
    %c0_8 = arith.constant 0 : index
    %28 = vector.load %arg3[%c0_7, %c0_8] : memref<1x64xf32, #tpu.memory_space<vmem>>, vector<1x64xf32>
    %29 = vector.broadcast %28 : vector<1x64xf32> to vector<8x64xf32>
    %30 = arith.addf %27, %29 : vector<8x64xf32>
    %31 = vector.extract_strided_slice %0 {offsets = [0, 192], sizes = [8, 2], strides = [1, 1]} : vector<8x256xbf16> to vector<8x2xbf16>
    %32 = arith.extf %31 : vector<8x2xbf16> to vector<8x2xf32>
    %33 = vector.extract_strided_slice %32 {offsets = [0, 0], sizes = [8, 1], strides = [1, 1]} : vector<8x2xf32> to vector<8x1xf32>
    %34 = arith.negf %33 : vector<8x1xf32>
    %35 = math.exp %34 : vector<8x1xf32>
    %cst_9 = arith.constant 1.000000e+00 : f32
    %36 = vector.broadcast %cst_9 : f32 to vector<8x1xf32>
    %37 = arith.addf %36, %35 : vector<8x1xf32>
    %38 = arith.divf %36, %37 : vector<8x1xf32>
    %39 = vector.extract_strided_slice %32 {offsets = [0, 1], sizes = [8, 1], strides = [1, 1]} : vector<8x2xf32> to vector<8x1xf32>
    %40 = arith.negf %39 : vector<8x1xf32>
    %41 = math.exp %40 : vector<8x1xf32>
    %cst_10 = arith.constant 1.000000e+00 : f32
    %42 = vector.broadcast %cst_10 : f32 to vector<8x1xf32>
    %43 = arith.addf %42, %41 : vector<8x1xf32>
    %44 = arith.divf %42, %43 : vector<8x1xf32>
    %cst_11 = arith.constant 2.000000e+00 : f32
    %45 = vector.broadcast %cst_11 : f32 to vector<8x1xf32>
    %46 = arith.addf %45, %44 : vector<8x1xf32>
    %47 = arith.subf %46, %38 : vector<8x1xf32>
    %48 = vector.broadcast %47 : vector<8x1xf32> to vector<8x64xf32>
    %49 = arith.mulf %30, %48 : vector<8x64xf32>
    %50 = arith.truncf %49 : vector<8x64xf32> to vector<8x64xbf16>
    %c0_12 = arith.constant 0 : index
    %c0_13 = arith.constant 0 : index
    %51 = vector.load %arg4[%c0_12, %c0_13] : memref<64x128xbf16, #tpu.memory_space<vmem>>, vector<64x128xbf16>
    %cst_14 = arith.constant dense<0.000000e+00> : vector<8x128xf32>
    %52 = tpu.matmul %50, %51, %cst_14 {dimension_numbers = #tpu.dot_dimension_numbers<[1], [0], [0], [1], [0, 0, 1, 1], [], []>} : vector<8x64xbf16>, vector<64x128xbf16>, vector<8x128xf32> -> vector<8x128xf32>
    %c0_15 = arith.constant 0 : index
    %c0_16 = arith.constant 0 : index
    %53 = vector.load %arg5[%c0_15, %c0_16] : memref<1x128xf32, #tpu.memory_space<vmem>>, vector<1x128xf32>
    %54 = vector.broadcast %53 : vector<1x128xf32> to vector<8x128xf32>
    %55 = arith.addf %52, %54 : vector<8x128xf32>
    %cst_17 = arith.constant 0.000000e+00 : f32
    %56 = vector.broadcast %cst_17 : f32 to vector<8x128xf32>
    %57 = arith.maximumf %55, %56 : vector<8x128xf32>
    %c0_18 = arith.constant 0 : index
    %c0_19 = arith.constant 0 : index
    %58 = vector.load %arg6[%c0_18, %c0_19] : memref<8x128xf32, #tpu.memory_space<vmem>>, vector<8x128xf32>
    tpu.vector_store %arg6[%c0_18, %c0_19], %57 {strides = array<i32>} : memref<8x128xf32, #tpu.memory_space<vmem>>, vector<8x128xf32>,
    return
  }
  func.func @transform_0(%arg0: i32) -> (i32, i32) {
    %c0_i32 = arith.constant 0 : i32
    %c0_i32_0 = arith.constant 0 : i32
    return %c0_i32, %arg0 : i32, i32
  }
  func.func @transform_1(%arg0: i32) -> (i32, i32) {
    %c0_i32 = arith.constant 0 : i32
    %c0_i32_0 = arith.constant 0 : i32
    %c0_i32_1 = arith.constant 0 : i32
    return %c0_i32, %c0_i32_0 : i32, i32
  }
  func.func @transform_2(%arg0: i32) -> (i32, i32) {
    %c0_i32 = arith.constant 0 : i32
    %c0_i32_0 = arith.constant 0 : i32
    %c0_i32_1 = arith.constant 0 : i32
    return %c0_i32, %c0_i32_0 : i32, i32
  }
  func.func @transform_3(%arg0: i32) -> (i32, i32) {
    %c0_i32 = arith.constant 0 : i32
    %c0_i32_0 = arith.constant 0 : i32
    %c0_i32_1 = arith.constant 0 : i32
    return %c0_i32, %c0_i32_0 : i32, i32
  }
  func.func @transform_4(%arg0: i32) -> (i32, i32) {
    %c0_i32 = arith.constant 0 : i32
    %c0_i32_0 = arith.constant 0 : i32
    %c0_i32_1 = arith.constant 0 : i32
    return %c0_i32, %c0_i32_0 : i32, i32
  }
  func.func @transform_5(%arg0: i32) -> (i32, i32) {
    %c0_i32 = arith.constant 0 : i32
    %c0_i32_0 = arith.constant 0 : i32
    return %c0_i32, %arg0 : i32, i32
  }
}

module attributes {stable_mosaic.version = 11 : i64} {
  func.func @_expand_qkvg_kernel(%arg0: i32, %arg1: memref<16x32xf32, #tpu.memory_space<vmem>>, %arg2: memref<32x64xbf16, #tpu.memory_space<vmem>>, %arg3: memref<1x64xf32, #tpu.memory_space<vmem>>, %arg4: memref<64x256xbf16, #tpu.memory_space<vmem>>, %arg5: memref<1x256xf32, #tpu.memory_space<vmem>>, %arg6: memref<16x256xbf16, #tpu.memory_space<vmem>>) attributes {dimension_semantics = [#tpu.dimension_semantics<parallel>], iteration_bounds = array<i64: 1>, scalar_prefetch = 0 : i64, scratch_operands = 0 : i64, tpu.core_type = #tpu.core_type<tc>, window_params = [{transform_indices = @transform_0, window_bounds = array<i64: 16, 32>}, {pipeline_mode = #tpu.pipeline_mode<synchronous>, transform_indices = @transform_1, window_bounds = array<i64: 32, 64>}, {pipeline_mode = #tpu.pipeline_mode<synchronous>, transform_indices = @transform_2, window_bounds = array<i64: 1, 64>}, {pipeline_mode = #tpu.pipeline_mode<synchronous>, transform_indices = @transform_3, window_bounds = array<i64: 64, 256>}, {pipeline_mode = #tpu.pipeline_mode<synchronous>, transform_indices = @transform_4, window_bounds = array<i64: 1, 256>}, {transform_indices = @transform_5, window_bounds = array<i64: 16, 256>}]} {
    %c0 = arith.constant 0 : index
    %c0_0 = arith.constant 0 : index
    %0 = vector.load %arg1[%c0, %c0_0] : memref<16x32xf32, #tpu.memory_space<vmem>>, vector<16x32xf32>
    %1 = arith.truncf %0 : vector<16x32xf32> to vector<16x32xbf16>
    %c0_1 = arith.constant 0 : index
    %c0_2 = arith.constant 0 : index
    %2 = vector.load %arg2[%c0_1, %c0_2] : memref<32x64xbf16, #tpu.memory_space<vmem>>, vector<32x64xbf16>
    %cst = arith.constant dense<0.000000e+00> : vector<16x64xf32>
    %3 = tpu.matmul %1, %2, %cst {dimension_numbers = #tpu.dot_dimension_numbers<[1], [0], [0], [1], [0, 0, 1, 1], [], []>} : vector<16x32xbf16>, vector<32x64xbf16>, vector<16x64xf32> -> vector<16x64xf32>
    %c0_3 = arith.constant 0 : index
    %c0_4 = arith.constant 0 : index
    %4 = vector.load %arg3[%c0_3, %c0_4] : memref<1x64xf32, #tpu.memory_space<vmem>>, vector<1x64xf32>
    %5 = vector.broadcast %4 : vector<1x64xf32> to vector<16x64xf32>
    %6 = arith.addf %3, %5 : vector<16x64xf32>
    %cst_5 = arith.constant 0.000000e+00 : f32
    %7 = vector.broadcast %cst_5 : f32 to vector<16x64xf32>
    %8 = arith.maximumf %6, %7 : vector<16x64xf32>
    %9 = arith.truncf %8 : vector<16x64xf32> to vector<16x64xbf16>
    %c0_6 = arith.constant 0 : index
    %c0_7 = arith.constant 0 : index
    %10 = vector.load %arg4[%c0_6, %c0_7] : memref<64x256xbf16, #tpu.memory_space<vmem>>, vector<64x256xbf16>
    %cst_8 = arith.constant dense<0.000000e+00> : vector<16x256xf32>
    %11 = tpu.matmul %9, %10, %cst_8 {dimension_numbers = #tpu.dot_dimension_numbers<[1], [0], [0], [1], [0, 0, 1, 1], [], []>} : vector<16x64xbf16>, vector<64x256xbf16>, vector<16x256xf32> -> vector<16x256xf32>
    %c0_9 = arith.constant 0 : index
    %c0_10 = arith.constant 0 : index
    %12 = vector.load %arg5[%c0_9, %c0_10] : memref<1x256xf32, #tpu.memory_space<vmem>>, vector<1x256xf32>
    %13 = vector.broadcast %12 : vector<1x256xf32> to vector<16x256xf32>
    %14 = arith.addf %11, %13 : vector<16x256xf32>
    %15 = arith.truncf %14 : vector<16x256xf32> to vector<16x256xbf16>
    %c0_11 = arith.constant 0 : index
    %c0_12 = arith.constant 0 : index
    %16 = vector.load %arg6[%c0_11, %c0_12] : memref<16x256xbf16, #tpu.memory_space<vmem>>, vector<16x256xbf16>
    tpu.vector_store %arg6[%c0_11, %c0_12], %15 {strides = array<i32>} : memref<16x256xbf16, #tpu.memory_space<vmem>>, vector<16x256xbf16>,
    return
  }
  func.func @transform_0(%arg0: i32) -> (i32, i32) {
    %c0_i32 = arith.constant 0 : i32
    %c0_i32_0 = arith.constant 0 : i32
    return %arg0, %c0_i32 : i32, i32
  }
  func.func @transform_1(%arg0: i32) -> (i32, i32) {
    %c0_i32 = arith.constant 0 : i32
    %c0_i32_0 = arith.constant 0 : i32
    %c0_i32_1 = arith.constant 0 : i32
    return %c0_i32, %c0_i32_0 : i32, i32
  }
  func.func @transform_2(%arg0: i32) -> (i32, i32) {
    %c0_i32 = arith.constant 0 : i32
    %c0_i32_0 = arith.constant 0 : i32
    %c0_i32_1 = arith.constant 0 : i32
    return %c0_i32, %c0_i32_0 : i32, i32
  }
  func.func @transform_3(%arg0: i32) -> (i32, i32) {
    %c0_i32 = arith.constant 0 : i32
    %c0_i32_0 = arith.constant 0 : i32
    %c0_i32_1 = arith.constant 0 : i32
    return %c0_i32, %c0_i32_0 : i32, i32
  }
  func.func @transform_4(%arg0: i32) -> (i32, i32) {
    %c0_i32 = arith.constant 0 : i32
    %c0_i32_0 = arith.constant 0 : i32
    %c0_i32_1 = arith.constant 0 : i32
    return %c0_i32, %c0_i32_0 : i32, i32
  }
  func.func @transform_5(%arg0: i32) -> (i32, i32) {
    %c0_i32 = arith.constant 0 : i32
    %c0_i32_0 = arith.constant 0 : i32
    return %arg0, %c0_i32 : i32, i32
  }
}

</mosaic_0001>

<llo_original>
// kernel: moyu_attn_layer.2
$region0: #{moyu_attn_layer.2}
  #allocation0 [shape = 'u32[]', space=smem, size = 0x4, offset = 0x4, fixed_abs, tag = 'smem constant byte address 0x4 - core index']
  #allocation1 [shape = 'u32[72,128]{1,0:T(1,128)}', space=vmem, size = 0x9000, scoped, tag = 'internal scratch']
  %s0 = inlined_call_operand.hbm [shape: f32[16,32], index: 0, kind: input, shape index: {}]
  %s1 = inlined_call_operand.hbm [shape: bf16[32,64], index: 1, kind: input, shape index: {}]
  %s2 = inlined_call_operand.hbm [shape: f32[1,64], index: 2, kind: input, shape index: {}]
  %s3 = inlined_call_operand.hbm [shape: bf16[64,256], index: 3, kind: input, shape index: {}]
  %s4 = inlined_call_operand.hbm [shape: f32[1,256], index: 4, kind: input, shape index: {}]
  %s5 = inlined_call_operand.vmem [shape: bf16[16,256], index: 5, kind: output, shape index: {}]
  %s6 = sld [smem:[#allocation0]]
  $region50: #{moyu_attn_layer.2} parent=0
    _
  %s8 = ssub.s32 1, %s6
  %s9 = scalar_select 0, %s8, %s6
  $region1: #{moyu_attn_layer.2} parent=0
    #allocation2 [shape = 'u8[8192]{0}', space=vmem, size = 0x2000, scoped, tag = 'input window, operand 0, single buffered']
    #allocation3 [shape = 's32[1]{0}', space=sflag, size = 0x4, scoped, tag = 'scoped memory for moyu_attn_layer.2']
    #allocation4 [shape = 'u8[8192]{0}', space=vmem, size = 0x2000, scoped, tag = 'input window, operand 1, single buffered']
    #allocation5 [shape = 's32[1]{0}', space=sflag, size = 0x4, scoped, tag = 'scoped memory for moyu_attn_layer.2']
    #allocation6 [shape = 'u8[512]{0}', space=vmem, size = 0x400, scoped, tag = 'input window, operand 2, single buffered']
    #allocation7 [shape = 'u8[32768]{0}', space=vmem, size = 0x8000, scoped, tag = 'input window, operand 3, single buffered']
    #allocation8 [shape = 's32[1]{0}', space=sflag, size = 0x4, scoped, tag = 'scoped memory for moyu_attn_layer.2']
    #allocation9 [shape = 'u8[1024]{0}', space=vmem, size = 0x400, scoped, tag = 'input window, operand 4, single buffered']
    %10 = vsyncpa [#allocation3], 0
    %11 = vsyncpa [#allocation5], 0
    %12 = vsyncpa [#allocation8], 0
    // Predicated region
    $region2: #{moyu_attn_layer.2} parent=1 // pred_check
      _
    $region3: #{moyu_attn_layer.2} parent=1 // pred_check_branch
      %14 = sbr.rel (0) target = $region5
    $region4: #{moyu_attn_layer.2} parent=1 // pred_region
      %16 = vsyncadd [#allocation3], 0
      %s17 = sshll.u32 %s0, 4
      %s18 = int_to_ptr.hbm [resolvable:$true] %s17
      %s19 = sshll.u32 [#allocation2], 4
      %s20 = int_to_ptr.vmem [resolvable:$true] %s19
      %25 = dma.hbm_to_vmem [thread:$0]  %s18, 256, %s20, [#allocation3], 128, 128, 8
    $region5: #{moyu_attn_layer.2} parent=1 // pred_fallthru
      _
    // Predicated region
    $region6: #{moyu_attn_layer.2} parent=1 // pred_check
      _
    $region7: #{moyu_attn_layer.2} parent=1 // pred_check_branch
      %27 = sbr.rel (0) target = $region9
    $region8: #{moyu_attn_layer.2} parent=1 // pred_region
      %29 = vsyncadd [#allocation5], 0
      %s30 = sshll.u32 %s1, 4
      %s31 = int_to_ptr.hbm [resolvable:$true] %s30
      %s32 = sshll.u32 [#allocation4], 4
      %s33 = int_to_ptr.vmem [resolvable:$true] %s32
      %38 = dma.hbm_to_vmem [thread:$0]  %s31, 256, %s33, [#allocation5], 64, 64, 4
    $region9: #{moyu_attn_layer.2} parent=1 // pred_fallthru
      _
    // Predicated region
    $region10: #{moyu_attn_layer.2} parent=1 // pred_check
      _
    $region11: #{moyu_attn_layer.2} parent=1 // pred_check_branch
      %40 = sbr.rel (0) target = $region13
    $region12: #{moyu_attn_layer.2} parent=1 // pred_region
      %42 = vsyncadd [#allocation5], 0
      %s44 = sshll.u32 %s2, 4
      %s45 = int_to_ptr.hbm [resolvable:$true] %s44
      %s46 = sshll.u32 [#allocation6], 4
      %s47 = int_to_ptr.vmem [resolvable:$true] %s46
      %49 = dma.hbm_to_vmem [thread:$0]  %s45, 16, %s47, [#allocation5]
    $region13: #{moyu_attn_layer.2} parent=1 // pred_fallthru
      _
    // Predicated region
    $region14: #{moyu_attn_layer.2} parent=1 // pred_check
      _
    $region15: #{moyu_attn_layer.2} parent=1 // pred_check_branch
      %51 = sbr.rel (0) target = $region17
    $region16: #{moyu_attn_layer.2} parent=1 // pred_region
      %53 = vsyncadd [#allocation8], 0
      %s54 = sshll.u32 %s3, 4
      %s55 = int_to_ptr.hbm [resolvable:$true] %s54
      %s56 = sshll.u32 [#allocation7], 4
      %s57 = int_to_ptr.vmem [resolvable:$true] %s56
      %62 = dma.hbm_to_vmem [thread:$0]  %s55, 1024, %s57, [#allocation8], 128, 128, 8
    $region17: #{moyu_attn_layer.2} parent=1 // pred_fallthru
      _
    // Predicated region
    $region18: #{moyu_attn_layer.2} parent=1 // pred_check
      _
    $region19: #{moyu_attn_layer.2} parent=1 // pred_check_branch
      %64 = sbr.rel (0) target = $region21
    $region20: #{moyu_attn_layer.2} parent=1 // pred_region
      %66 = vsyncadd [#allocation8], 0
      %s68 = sshll.u32 %s4, 4
      %s69 = int_to_ptr.hbm [resolvable:$true] %s68
      %s70 = sshll.u32 [#allocation9], 4
      %s71 = int_to_ptr.vmem [resolvable:$true] %s70
      %73 = dma.hbm_to_vmem [thread:$0]  %s69, 32, %s71, [#allocation8]
    $region21: #{moyu_attn_layer.2} parent=1 // pred_fallthru
      _
    // Predicated region
    $region22: #{moyu_attn_layer.2} parent=1 // pred_check
      _
    $region23: #{moyu_attn_layer.2} parent=1 // pred_check_branch
      %75 = sbr.rel (0) target = $region25
    $region24: #{moyu_attn_layer.2} parent=1 // pred_region
      %77 = dma.done [#allocation3], 256
    $region25: #{moyu_attn_layer.2} parent=1 // pred_fallthru
      _
    // Predicated region
    $region26: #{moyu_attn_layer.2} parent=1 // pred_check
      _
    $region27: #{moyu_attn_layer.2} parent=1 // pred_check_branch
      %79 = sbr.rel (0) target = $region29
    $region28: #{moyu_attn_layer.2} parent=1 // pred_region
      %81 = dma.done [#allocation5], 256
    $region29: #{moyu_attn_layer.2} parent=1 // pred_fallthru
      _
    // Predicated region
    $region30: #{moyu_attn_layer.2} parent=1 // pred_check
      _
    $region31: #{moyu_attn_layer.2} parent=1 // pred_check_branch
      %83 = sbr.rel (0) target = $region33
    $region32: #{moyu_attn_layer.2} parent=1 // pred_region
      %85 = dma.done [#allocation5], 16
    $region33: #{moyu_attn_layer.2} parent=1 // pred_fallthru
      _
    // Predicated region
    $region34: #{moyu_attn_layer.2} parent=1 // pred_check
      _
    $region35: #{moyu_attn_layer.2} parent=1 // pred_check_branch
      %87 = sbr.rel (0) target = $region37
    $region36: #{moyu_attn_layer.2} parent=1 // pred_region
      %89 = dma.done [#allocation8], 1024
    $region37: #{moyu_attn_layer.2} parent=1 // pred_fallthru
      _
    // Predicated region
    $region38: #{moyu_attn_layer.2} parent=1 // pred_check
      _
    $region39: #{moyu_attn_layer.2} parent=1 // pred_check_branch
      %91 = sbr.rel (0) target = $region41
    $region40: #{moyu_attn_layer.2} parent=1 // pred_region
      %93 = dma.done [#allocation8], 32
    $region41: #{moyu_attn_layer.2} parent=1 // pred_fallthru
      _
    %v95 = vld [vmem:[#allocation2] sm:$0xff]
    %v96 = vld [vmem:[#allocation2 + $0x8] sm:$0xff]
    %v97 = vpack.c.bf16 %v96, %v95
    %v98 = vld [vmem:[#allocation4] sm:$0xf]
    %v99 = vld [vmem:[#allocation4 + $0x4] sm:$0xf]
    %v100 = vld [vmem:[#allocation4 + $0x8] sm:$0xf]
    %v101 = vld [vmem:[#allocation4 + $0xc] sm:$0xf]
    %v102 = vld [vmem:[#allocation6] sm:$0x1]
    %v104 = vperm.slane %v102, 0
    %v110 = vunpack.c.l.b16 %v98
    %v111 = vunpack.c.l.b16 %v99
    %v112 = vunpack.c.l.b16 %v100
    %v113 = vunpack.c.l.b16 %v101
    %v114 = vpack.c.b16 %v111, %v110
    %v115 = vpack.c.b16 %v113, %v112
    %vm118 = vcmask 261120
    %v120 = vsel %vm118, %v97, 0
    %122 = vmatpush.bf16.msra.mxu0 0
    %123 = vmatpush.bf16.msra.mxu0 0
    %124 = vmatpush.bf16.msra.mxu0 0
    %125 = vmatpush.bf16.msra.mxu0 0
    %126 = vmatpush.bf16.msra.mxu0 0
    %127 = vmatpush.bf16.msra.mxu0 0
    %128 = vmatpush.bf16.msra.mxu0 %v115
    %129 = vmatpush.bf16.msra.mxu0 %v114
    %130 = vmatmul.bf16.gmra.mxu0 %v120
    %v131 = vpop.f32.mrf.mxu0
    %v132 = vadd.f32 %v104, %v131
    %v133 = vpop.f32.mrf.mxu0
    %v134 = vadd.f32 %v104, %v133
    %135 = vdwg.mxu0
    %v136 = vmax.f32 %v132, 0.0
    %v137 = vmax.f32 %v134, 0.0
    %v138 = vpack.c.bf16 %v137, %v136
    %v139 = vld [vmem:[#allocation7] sm:$0xff]
    %v140 = vld [vmem:[#allocation7 + $0x8] sm:$0xff]
    %v141 = vld [vmem:[#allocation7 + $0x10] sm:$0xff]
    %v142 = vld [vmem:[#allocation7 + $0x18] sm:$0xff]
    %v143 = vld [vmem:[#allocation7 + $0x20] sm:$0xff]
    %v144 = vld [vmem:[#allocation7 + $0x28] sm:$0xff]
    %v145 = vld [vmem:[#allocation7 + $0x30] sm:$0xff]
    %v146 = vld [vmem:[#allocation7 + $0x38] sm:$0xff]
    %v147 = vld [vmem:[#allocation9] sm:$0x3]
    %v149 = vperm.slane %v147, 0
    %v150 = vperm.slane %v147, 1
    %v161 = vunpack.c.l.b16 %v139
    %v162 = vunpack.c.h.b16 %v139
    %v163 = vunpack.c.l.b16 %v140
    %v164 = vunpack.c.h.b16 %v140
    %v165 = vunpack.c.l.b16 %v141
    %v166 = vunpack.c.h.b16 %v141
    %v167 = vunpack.c.l.b16 %v142
    %v168 = vunpack.c.h.b16 %v142
    %v169 = vunpack.c.l.b16 %v143
    %v170 = vunpack.c.h.b16 %v143
    %v171 = vunpack.c.l.b16 %v144
    %v172 = vunpack.c.h.b16 %v144
    %v173 = vunpack.c.l.b16 %v145
    %v174 = vunpack.c.h.b16 %v145
    %v175 = vunpack.c.l.b16 %v146
    %v176 = vunpack.c.h.b16 %v146
    %v177 = vpack.c.b16 %v163, %v161
    %v178 = vpack.c.b16 %v164, %v162
    %v179 = vpack.c.b16 %v167, %v165
    %v180 = vpack.c.b16 %v168, %v166
    %v181 = vpack.c.b16 %v171, %v169
    %v182 = vpack.c.b16 %v172, %v170
    %v183 = vpack.c.b16 %v175, %v173
    %v184 = vpack.c.b16 %v176, %v174
    %vm193 = vcmask 523264
    %v195 = vsel %vm193, %v138, 0
    %197 = vmatpush.bf16.msra.mxu0 0
    %198 = vmatpush.bf16.msra.mxu0 0
    %199 = vmatpush.bf16.msra.mxu0 0
    %200 = vmatpush.bf16.msra.mxu0 0
    %201 = vmatpush.bf16.msra.mxu0 %v183
    %202 = vmatpush.bf16.msra.mxu0 %v181
    %203 = vmatpush.bf16.msra.mxu0 %v179
    %204 = vmatpush.bf16.msra.mxu0 %v177
    %205 = vmatmul.bf16.gmra.mxu0 %v195
    %v206 = vpop.f32.mrf.mxu0
    %v207 = vadd.f32 %v149, %v206
    %v208 = vpop.f32.mrf.mxu0
    %v209 = vadd.f32 %v149, %v208
    %210 = vdwg.mxu0
    %211 = vmatpush.bf16.msra.mxu0 0
    %212 = vmatpush.bf16.msra.mxu0 0
    %213 = vmatpush.bf16.msra.mxu0 0
    %214 = vmatpush.bf16.msra.mxu0 0
    %215 = vmatpush.bf16.msra.mxu0 %v184
    %216 = vmatpush.bf16.msra.mxu0 %v182
    %217 = vmatpush.bf16.msra.mxu0 %v180
    %218 = vmatpush.bf16.msra.mxu0 %v178
    %219 = vmatmul.bf16.gmra.mxu0 %v195
    %v220 = vpop.f32.mrf.mxu0
    %v221 = vadd.f32 %v150, %v220
    %v222 = vpop.f32.mrf.mxu0
    %v223 = vadd.f32 %v150, %v222
    %224 = vdwg.mxu0
    %v225 = vpack.c.bf16 %v221, %v207
    %v226 = vpack.c.bf16 %v223, %v209
    %227 = vst [vmem:[%s5] sm:$0xff] %v225
    %228 = vst [vmem:[%s5 + $0x8] sm:$0xff] %v226
    // Predicated region
    $region42: #{moyu_attn_layer.2} parent=1 // pred_check
      _
    $region43: #{moyu_attn_layer.2} parent=1 // pred_check_branch
      %230 = sbr.rel (0) target = $region45
    $region44: #{moyu_attn_layer.2} parent=1 // pred_region
      _
    $region45: #{moyu_attn_layer.2} parent=1 // pred_fallthru
      _
    // Predicated region
    $region46: #{moyu_attn_layer.2} parent=1 // pred_check
      _
    $region47: #{moyu_attn_layer.2} parent=1 // pred_check_branch
      %232 = sbr.rel (0) target = $region49
    $region48: #{moyu_attn_layer.2} parent=1 // pred_region
      _
    $region49: #{moyu_attn_layer.2} parent=1 // pred_fallthru
      _
    %233 = vsyncpa [#allocation3], 1
    %234 = vsyncpa [#allocation5], 1
    %235 = vsyncpa [#allocation8], 1

// kernel: moyu_attn_layer.3
$region0: #{moyu_attn_layer.3}
  #allocation0 [shape = 'u32[]', space=smem, size = 0x4, offset = 0x4, fixed_abs, tag = 'smem constant byte address 0x4 - core index']
  #allocation1 [shape = 'u32[72,128]{1,0:T(1,128)}', space=vmem, size = 0x9000, scoped, tag = 'internal scratch']
  %s0 = inlined_call_operand.vmem [shape: bf16[8,512], index: 0, kind: input, shape index: {}]
  %s1 = inlined_call_operand.vmem [shape: bf16[64,64], index: 1, kind: input, shape index: {}]
  %s2 = inlined_call_operand.vmem [shape: f32[1,64], index: 2, kind: input, shape index: {}]
  %s3 = inlined_call_operand.hbm [shape: bf16[64,128], index: 3, kind: input, shape index: {}]
  %s4 = inlined_call_operand.vmem [shape: f32[1,128], index: 4, kind: input, shape index: {}]
  %s5 = inlined_call_operand.vmem [shape: f32[8,256], index: 5, kind: output, shape index: {}]
  %s6 = sld [smem:[#allocation0]]
  $region57: #{moyu_attn_layer.3} parent=0
    _
  %s8 = ssub.s32 1, %s6
  %s9 = scalar_select 0, %s8, %s6
  $region1: #{moyu_attn_layer.3} parent=0
    #allocation2 [shape = 'u8[16384]{0}', space=vmem, size = 0x4000, scoped, tag = 'input window, operand 3, single buffered']
    #allocation3 [shape = 's32[2]{0}', space=sflag, size = 0x8, scoped, tag = 'scoped memory for moyu_attn_layer.3']
    %10 = vsyncpa [#allocation3], 0
    loop: start=0, step=1, limit=4
    $region2: #{moyu_attn_layer.3} parent=1 // loop_pre_header
      _
    $region3: #{moyu_attn_layer.3} parent=1 // loop_header
      %s12 = sphi 0, %s16
      %p13 = scmp.ge.s32.totalorder %s12, 4
      %s22 = sphi 0, %s24
      %s25 = sphi 0, %s22
      %s26 = sphi 0, %s25
      %s42 = sphi 0, %s26
      %s46 = sphi 0, %s46
      %s48 = sphi 0, %s46
      %s49 = sphi 0, %s48
      %s63 = sphi 0, %s49
      %s67 = sphi 0, %s67
      %s69 = sphi 0, %s67
      %s70 = sphi 0, %s69
      %s84 = sphi 0, %s70
      %s88 = sphi 0, %s88
      %s90 = sphi 0, %s88
      %s91 = sphi 0, %s90
      %s105 = sphi 0, %s91
      %s109 = sphi 0, %s109
      %s111 = sphi 0, %s109
      %s112 = sphi 0, %s111
      %s126 = sphi 0, %s112
      %s132 = sphi 0, %s134
      %s135 = sphi 0, %s132
      %s136 = sphi 0, %s135
      %s152 = sphi 0, %s136
    $region4: #{moyu_attn_layer.3} parent=1 // loop_header_branch
      %15 = sbr.rel (%p13) target = $region8
    $region5: #{moyu_attn_layer.3} parent=1 // loop_body
      %s17 = ssub.s32 %s12, 1
      %s18 = ssub.s32 %s12, 2
      %s19 = sadd.s32 %s12, 1
      %s20 = ssub.s32 %s12, %s19
      %p21 = scmp.eq.s32.totalorder %s20, 0
      %s23 = sadd.s32 %s22, 1
      %s24 = scalar_select %p21, %s22, %s23
      %p27 = pneg %p21
      %p28 = scmp.eq.s32.totalorder %s12, 1
      %p29 = por %p27, %p28
      %p30 = scmp.ne.s32.totalorder %s22, %s25
      %p31 = scmp.eq.s32.totalorder %s12, 0
      %p32 = por %p30, %p31
      %p33 = scmp.ne.s32.totalorder %s22, %s25
      %p34 = scmp.eq.s32.totalorder %s17, 1
      %p35 = por %p33, %p34
      %p36 = scmp.ne.s32.totalorder %s25, %s26
      %p37 = scmp.eq.s32.totalorder %s17, 0
      %p38 = por %p36, %p37
      %p39 = scmp.ne.s32.totalorder %s25, %s26
      %p40 = scmp.eq.s32.totalorder %s18, 1
      %p41 = por %p39, %p40
      %p43 = scmp.ne.s32.totalorder %s26, %s42
      %p44 = scmp.eq.s32.totalorder %s18, 0
      %p45 = por %p43, %p44
      %s47 = sadd.s32 %s46, 1
      %p50 = scmp.eq.s32.totalorder %s12, 1
      %p51 = scmp.ne.s32.totalorder %s46, %s48
      %p52 = scmp.eq.s32.totalorder %s12, 0
      %p53 = por %p51, %p52
      %p54 = scmp.ne.s32.totalorder %s46, %s48
      %p55 = scmp.eq.s32.totalorder %s17, 1
      %p56 = por %p54, %p55
      %p57 = scmp.ne.s32.totalorder %s48, %s49
      %p58 = scmp.eq.s32.totalorder %s17, 0
      %p59 = por %p57, %p58
      %p60 = scmp.ne.s32.totalorder %s48, %s49
      %p61 = scmp.eq.s32.totalorder %s18, 1
      %p62 = por %p60, %p61
      %p64 = scmp.ne.s32.totalorder %s49, %s63
      %p65 = scmp.eq.s32.totalorder %s18, 0
      %p66 = por %p64, %p65
      %s68 = sadd.s32 %s67, 1
      %p71 = scmp.eq.s32.totalorder %s12, 1
      %p72 = scmp.ne.s32.totalorder %s67, %s69
      %p73 = scmp.eq.s32.totalorder %s12, 0
      %p74 = por %p72, %p73
      %p75 = scmp.ne.s32.totalorder %s67, %s69
      %p76 = scmp.eq.s32.totalorder %s17, 1
      %p77 = por %p75, %p76
      %p78 = scmp.ne.s32.totalorder %s69, %s70
      %p79 = scmp.eq.s32.totalorder %s17, 0
      %p80 = por %p78, %p79
      %p81 = scmp.ne.s32.totalorder %s69, %s70
      %p82 = scmp.eq.s32.totalorder %s18, 1
      %p83 = por %p81, %p82
      %p85 = scmp.ne.s32.totalorder %s70, %s84
      %p86 = scmp.eq.s32.totalorder %s18, 0
      %p87 = por %p85, %p86
      %s89 = sadd.s32 %s88, 1
      %p92 = scmp.eq.s32.totalorder %s12, 1
      %p93 = scmp.ne.s32.totalorder %s88, %s90
      %p94 = scmp.eq.s32.totalorder %s12, 0
      %p95 = por %p93, %p94
      %p96 = scmp.ne.s32.totalorder %s88, %s90
      %p97 = scmp.eq.s32.totalorder %s17, 1
      %p98 = por %p96, %p97
      %p99 = scmp.ne.s32.totalorder %s90, %s91
      %p100 = scmp.eq.s32.totalorder %s17, 0
      %p101 = por %p99, %p100
      %p102 = scmp.ne.s32.totalorder %s90, %s91
      %p103 = scmp.eq.s32.totalorder %s18, 1
      %p104 = por %p102, %p103
      %p106 = scmp.ne.s32.totalorder %s91, %s105
      %p107 = scmp.eq.s32.totalorder %s18, 0
      %p108 = por %p106, %p107
      %s110 = sadd.s32 %s109, 1
      %p113 = scmp.eq.s32.totalorder %s12, 1
      %p114 = scmp.ne.s32.totalorder %s109, %s111
      %p115 = scmp.eq.s32.totalorder %s12, 0
      %p116 = por %p114, %p115
      %p117 = scmp.ne.s32.totalorder %s109, %s111
      %p118 = scmp.eq.s32.totalorder %s17, 1
      %p119 = por %p117, %p118
      %p120 = scmp.ne.s32.totalorder %s111, %s112
      %p121 = scmp.eq.s32.totalorder %s17, 0
      %p122 = por %p120, %p121
      %p123 = scmp.ne.s32.totalorder %s111, %s112
      %p124 = scmp.eq.s32.totalorder %s18, 1
      %p125 = por %p123, %p124
      %p127 = scmp.ne.s32.totalorder %s112, %s126
      %p128 = scmp.eq.s32.totalorder %s18, 0
      %p129 = por %p127, %p128
      %s130 = ssub.s32 %s12, %s19
      %p131 = scmp.eq.s32.totalorder %s130, 0
      %s133 = sadd.s32 %s132, 1
      %s134 = scalar_select %p131, %s132, %s133
      %p137 = pneg %p131
      %p138 = scmp.eq.s32.totalorder %s12, 1
      %p139 = por %p137, %p138
      %p140 = scmp.ne.s32.totalorder %s132, %s135
      %p141 = scmp.eq.s32.totalorder %s12, 0
      %p142 = por %p140, %p141
      %p143 = scmp.ne.s32.totalorder %s132, %s135
      %p144 = scmp.eq.s32.totalorder %s17, 1
      %p145 = por %p143, %p144
      %p146 = scmp.ne.s32.totalorder %s135, %s136
      %p147 = scmp.eq.s32.totalorder %s17, 0
      %p148 = por %p146, %p147
      %p149 = scmp.ne.s32.totalorder %s135, %s136
      %p150 = scmp.eq.s32.totalorder %s18, 1
      %p151 = por %p149, %p150
      %p153 = scmp.ne.s32.totalorder %s136, %s152
      %p154 = scmp.eq.s32.totalorder %s18, 0
      %p155 = por %p153, %p154
      %p156 = scmp.le.s32.totalorder 1, %s12
      %p157 = scmp.lt.s32.totalorder %s12, 3
      %p158 = pnand %p156, %p157
      %p159 = pneg %p158
      // Predicated region
      $region9: #{moyu_attn_layer.3} parent=5 // pred_check
        _
      $region10: #{moyu_attn_layer.3} parent=5 // pred_check_branch
        %161 = sbr.rel (%p158) target = $region12
      $region11: #{moyu_attn_layer.3} parent=5 // pred_region
        %s162 = ssub.s32 %s12, 1
        // Predicated region
        $region13: #{moyu_attn_layer.3} parent=11 // pred_check
          %p163 = pneg %p59
        $region14: #{moyu_attn_layer.3} parent=11 // pred_check_branch
          %165 = sbr.rel (%p163) target = $region16
        $region15: #{moyu_attn_layer.3} parent=11 // pred_region
          _
        $region16: #{moyu_attn_layer.3} parent=11 // pred_fallthru
          _
        // Predicated region
        $region17: #{moyu_attn_layer.3} parent=11 // pred_check
          %p166 = pneg %p80
        $region18: #{moyu_attn_layer.3} parent=11 // pred_check_branch
          %168 = sbr.rel (%p166) target = $region20
        $region19: #{moyu_attn_layer.3} parent=11 // pred_region
          _
        $region20: #{moyu_attn_layer.3} parent=11 // pred_fallthru
          _
        // Predicated region
        $region21: #{moyu_attn_layer.3} parent=11 // pred_check
          %p169 = pneg %p101
        $region22: #{moyu_attn_layer.3} parent=11 // pred_check_branch
          %171 = sbr.rel (%p169) target = $region24
        $region23: #{moyu_attn_layer.3} parent=11 // pred_region
          %173 = vsyncadd [#allocation3], 0
          %s174 = sshll.u32 %s3, 4
          %s175 = int_to_ptr.hbm [resolvable:$true] %s174
          %s176 = sshll.u32 [#allocation2], 4
          %s177 = int_to_ptr.vmem [resolvable:$true] %s176
          %182 = dma.hbm_to_vmem [thread:$0]  %s175, 512, %s177, [#allocation3], 64, 64, 4
        $region24: #{moyu_attn_layer.3} parent=11 // pred_fallthru
          _
        // Predicated region
        $region25: #{moyu_attn_layer.3} parent=11 // pred_check
          %p183 = pneg %p122
        $region26: #{moyu_attn_layer.3} parent=11 // pred_check_branch
          %185 = sbr.rel (%p183) target = $region28
        $region27: #{moyu_attn_layer.3} parent=11 // pred_region
          _
        $region28: #{moyu_attn_layer.3} parent=11 // pred_fallthru
          _
      $region12: #{moyu_attn_layer.3} parent=5 // pred_fallthru
        _
      %p186 = scmp.lt.s32.totalorder %s12, 2
      // Predicated region
      $region29: #{moyu_attn_layer.3} parent=5 // pred_check
        %p187 = pneg %p186
      $region30: #{moyu_attn_layer.3} parent=5 // pred_check_branch
        %189 = sbr.rel (%p187) target = $region32
      $region31: #{moyu_attn_layer.3} parent=5 // pred_region
        // Predicated region
        $region33: #{moyu_attn_layer.3} parent=31 // pred_check
          %p190 = pneg %p32
        $region34: #{moyu_attn_layer.3} parent=31 // pred_check_branch
          %192 = sbr.rel (%p190) target = $region36
        $region35: #{moyu_attn_layer.3} parent=31 // pred_region
          %s193 = smul.u32 2, %s12
          %p194 = scmp.lt.s32.totalorder %s193, 3
          %s195 = scalar_select %p194, %s193, 3
          %s196 = smul.addr %s195, 4
          %s197 = scalar_lea.vmem %s0, %s196
          %s198 = smul.u32 2, %s12
        $region36: #{moyu_attn_layer.3} parent=31 // pred_fallthru
          _
      $region32: #{moyu_attn_layer.3} parent=5 // pred_fallthru
        _
      %p199 = scmp.le.s32.totalorder 1, %s12
      %p200 = scmp.lt.s32.totalorder %s12, 3
      %p201 = pnand %p199, %p200
      %p202 = pneg %p201
      // Predicated region
      $region37: #{moyu_attn_layer.3} parent=5 // pred_check
        _
      $region38: #{moyu_attn_layer.3} parent=5 // pred_check_branch
        %204 = sbr.rel (%p201) target = $region40
      $region39: #{moyu_attn_layer.3} parent=5 // pred_region
        %s205 = ssub.s32 %s12, 1
        // Predicated region
        $region41: #{moyu_attn_layer.3} parent=39 // pred_check
          %p206 = pneg %p101
        $region42: #{moyu_attn_layer.3} parent=39 // pred_check_branch
          %208 = sbr.rel (%p206) target = $region44
        $region43: #{moyu_attn_layer.3} parent=39 // pred_region
          %210 = dma.done [#allocation3], 512
        $region44: #{moyu_attn_layer.3} parent=39 // pred_fallthru
          _
        %s211 = smul.u32 2, %s17
        %p212 = scmp.lt.s32.totalorder %s211, 3
        %s213 = scalar_select %p212, %s211, 3
        %s214 = smul.addr %s213, 4
        %s215 = scalar_lea.vmem %s0, %s214
        %p216 = pneg %p38
        %p217 = pneg %p35
        %p218 = pneg %p59
        %p219 = pneg %p56
        %p220 = pneg %p80
        %p221 = pneg %p77
        %p222 = pneg %p101
        %p223 = pneg %p98
        %p224 = pneg %p122
        %p225 = pneg %p119
        %p226 = pneg %p148
        %p227 = pneg %p145
        %p228 = scmp.lt.s32.totalorder %s17, 1
        %s229 = scalar_select %p228, %s17, 1
        %s230 = smul.addr %s229, 8
        %s231 = scalar_lea.vmem %s5, %s230
        %s232 = smul.u32 2, %s17
        %p233 = scmp.lt.s32.totalorder %s232, 3
        %s234 = scalar_select %p233, %s232, 3
        %s235 = smul.addr %s234, 4
        %s236 = scalar_lea.vmem %s0, %s235
        %s237 = smul.u32 2, %s17
        %p238 = scmp.lt.s32.totalorder %s17, 1
        %s239 = scalar_select %p238, %s17, 1
        %s240 = smul.addr %s239, 8
        %s241 = scalar_lea.vmem %s5, %s240
        %v243 = vld [vmem:[%s236] sm:$0xff]
        %245 = vrot.lane.b32.xlu0 %v243, 112
        %v246 = vpop.permute.xlu0 %245
        %247 = vrot.lane.b32.xlu0 %v243, 96
        %v248 = vpop.permute.xlu0 %247
        %249 = vrot.lane.b32.xlu0 %v243, 80
        %v250 = vpop.permute.xlu0 %249
        %v253 = vpack.i.b16 %v246, %v243
        %v254 = vshrl.u32 %v243, 16
        %v255 = vshrl.u32 %v246, 16
        %v256 = vpack.i.b16 %v255, %v254
        %v259 = vpack.i.b16 %v250, %v248
        %v260 = vshrl.u32 %v248, 16
        %v261 = vshrl.u32 %v250, 16
        %v262 = vpack.i.b16 %v261, %v260
        %v265 = vunpack.c.l.s4 1983009808
        %v266 = vunpack.c.0.s8 %v265
        %v267 = vperm.slane %v253, %v266
        %v270 = vunpack.c.l.s4 1983009808
        %v271 = vunpack.c.0.s8 %v270
        %v272 = vperm.slane %v259, %v271
        %v273 = vrot.slane %v272, 4
        %vm274 = vcmask 1047556
        %v275 = vsel %vm274, %v273, %v267
        %v276 = vrot.slane %v267, 4
        %v277 = vsel %vm274, %v272, %v276
        %v279 = vunpack.c.l.s4 1934713408
        %v280 = vunpack.c.0.s8 %v279
        %v281 = vperm.slane %v275, %v280
        %v283 = vunpack.c.l.s4 1934713408
        %v284 = vunpack.c.0.s8 %v283
        %v285 = vperm.slane %v277, %v284
        %v286 = vrot.slane %v281, 4
        %v287 = vsel %vm274, 0, %v286
        %v288 = vrot.slane %v285, 4
        %v289 = vsel %vm274, 0, %v288
        %v292 = vunpack.c.l.s4 1983009808
        %v293 = vunpack.c.0.s8 %v292
        %v294 = vperm.slane %v256, %v293
        %v297 = vunpack.c.l.s4 1983009808
        %v298 = vunpack.c.0.s8 %v297
        %v299 = vperm.slane %v262, %v298
        %v300 = vrot.slane %v299, 4
        %v301 = vsel %vm274, %v300, %v294
        %v302 = vrot.slane %v294, 4
        %v303 = vsel %vm274, %v299, %v302
        %v305 = vunpack.c.l.s4 1934713408
        %v306 = vunpack.c.0.s8 %v305
        %v307 = vperm.slane %v301, %v306
        %v309 = vunpack.c.l.s4 1934713408
        %v310 = vunpack.c.0.s8 %v309
        %v311 = vperm.slane %v303, %v310
        %v312 = vrot.slane %v307, 4
        %v313 = vsel %vm274, 0, %v312
        %v314 = vrot.slane %v311, 4
        %v315 = vsel %vm274, 0, %v314
        %v316 = vsel %vm274, %v288, %v281
        %v318 = vunpack.c.l.s4 1983009808
        %v319 = vunpack.c.0.s8 %v318
        %v320 = vperm.slane %v316, %v319
        %v321 = vrot.slane %v289, 4
        %v322 = vsel %vm274, %v321, %v287
        %v324 = vunpack.c.l.s4 1983009808
        %v325 = vunpack.c.0.s8 %v324
        %v326 = vperm.slane %v322, %v325
        %v327 = vrot.slane %v326, 4
        %v328 = vsel %vm274, %v327, %v320
        %v330 = vunpack.c.l.s4 1934713408
        %v331 = vunpack.c.0.s8 %v330
        %v332 = vperm.slane %v328, %v331
        %v333 = vrot.slane %v332, 4
        %v334 = vsel %vm274, 0, %v333
        %v335 = vsel %vm274, %v314, %v307
        %v337 = vunpack.c.l.s4 1983009808
        %v338 = vunpack.c.0.s8 %v337
        %v339 = vperm.slane %v335, %v338
        %v340 = vrot.slane %v315, 4
        %v341 = vsel %vm274, %v340, %v313
        %v343 = vunpack.c.l.s4 1983009808
        %v344 = vunpack.c.0.s8 %v343
        %v345 = vperm.slane %v341, %v344
        %v346 = vrot.slane %v345, 4
        %v347 = vsel %vm274, %v346, %v339
        %v349 = vunpack.c.l.s4 1934713408
        %v350 = vunpack.c.0.s8 %v349
        %v351 = vperm.slane %v347, %v350
        %v352 = vrot.slane %v351, 4
        %v353 = vsel %vm274, 0, %v352
        %v356 = vpack.i.b16 %v351, %v332
        %v357 = vshrl.u32 %v332, 16
        %v358 = vshrl.u32 %v351, 16
        %v359 = vpack.i.b16 %v358, %v357
        %v362 = vpack.i.b16 %v353, %v334
        %v363 = vshrl.u32 %v334, 16
        %v364 = vshrl.u32 %v353, 16
        %v365 = vpack.i.b16 %v364, %v363
        %366 = vrot.lane.b32.xlu0 %v243, 64
        %v367 = vpop.permute.xlu0 %366
        %368 = vrot.lane.b32.xlu0 %v246, 64
        %v369 = vpop.permute.xlu0 %368
        %370 = vrot.lane.b32.xlu0 %v248, 64
        %v371 = vpop.permute.xlu0 %370
        %372 = vrot.lane.b32.xlu0 %v250, 64
        %v373 = vpop.permute.xlu0 %372
        %v376 = vpack.i.b16 %v369, %v367
        %v377 = vshrl.u32 %v367, 16
        %v378 = vshrl.u32 %v369, 16
        %v379 = vpack.i.b16 %v378, %v377
        %v382 = vpack.i.b16 %v373, %v371
        %v383 = vshrl.u32 %v371, 16
        %v384 = vshrl.u32 %v373, 16
        %v385 = vpack.i.b16 %v384, %v383
        %v388 = vunpack.c.l.s4 1983009808
        %v389 = vunpack.c.0.s8 %v388
        %v390 = vperm.slane %v376, %v389
        %v393 = vunpack.c.l.s4 1983009808
        %v394 = vunpack.c.0.s8 %v393
        %v395 = vperm.slane %v382, %v394
        %v396 = vrot.slane %v395, 4
        %v397 = vsel %vm274, %v396, %v390
        %v398 = vrot.slane %v390, 4
        %v399 = vsel %vm274, %v395, %v398
        %v401 = vunpack.c.l.s4 1934713408
        %v402 = vunpack.c.0.s8 %v401
        %v403 = vperm.slane %v397, %v402
        %v405 = vunpack.c.l.s4 1934713408
        %v406 = vunpack.c.0.s8 %v405
        %v407 = vperm.slane %v399, %v406
        %v408 = vrot.slane %v403, 4
        %v409 = vsel %vm274, 0, %v408
        %v410 = vrot.slane %v407, 4
        %v411 = vsel %vm274, 0, %v410
        %v414 = vunpack.c.l.s4 1983009808
        %v415 = vunpack.c.0.s8 %v414
        %v416 = vperm.slane %v379, %v415
        %v419 = vunpack.c.l.s4 1983009808
        %v420 = vunpack.c.0.s8 %v419
        %v421 = vperm.slane %v385, %v420
        %v422 = vrot.slane %v421, 4
        %v423 = vsel %vm274, %v422, %v416
        %v424 = vrot.slane %v416, 4
        %v425 = vsel %vm274, %v421, %v424
        %v427 = vunpack.c.l.s4 1934713408
        %v428 = vunpack.c.0.s8 %v427
        %v429 = vperm.slane %v423, %v428
        %v431 = vunpack.c.l.s4 1934713408
        %v432 = vunpack.c.0.s8 %v431
        %v433 = vperm.slane %v425, %v432
        %v434 = vrot.slane %v429, 4
        %v435 = vsel %vm274, 0, %v434
        %v436 = vrot.slane %v433, 4
        %v437 = vsel %vm274, 0, %v436
        %v438 = vsel %vm274, %v410, %v403
        %v440 = vunpack.c.l.s4 1983009808
        %v441 = vunpack.c.0.s8 %v440
        %v442 = vperm.slane %v438, %v441
        %v443 = vrot.slane %v411, 4
        %v444 = vsel %vm274, %v443, %v409
        %v446 = vunpack.c.l.s4 1983009808
        %v447 = vunpack.c.0.s8 %v446
        %v448 = vperm.slane %v444, %v447
        %v449 = vrot.slane %v448, 4
        %v450 = vsel %vm274, %v449, %v442
        %v452 = vunpack.c.l.s4 1934713408
        %v453 = vunpack.c.0.s8 %v452
        %v454 = vperm.slane %v450, %v453
        %v455 = vrot.slane %v454, 4
        %v456 = vsel %vm274, 0, %v455
        %v457 = vsel %vm274, %v436, %v429
        %v459 = vunpack.c.l.s4 1983009808
        %v460 = vunpack.c.0.s8 %v459
        %v461 = vperm.slane %v457, %v460
        %v462 = vrot.slane %v437, 4
        %v463 = vsel %vm274, %v462, %v435
        %v465 = vunpack.c.l.s4 1983009808
        %v466 = vunpack.c.0.s8 %v465
        %v467 = vperm.slane %v463, %v466
        %v468 = vrot.slane %v467, 4
        %v469 = vsel %vm274, %v468, %v461
        %v471 = vunpack.c.l.s4 1934713408
        %v472 = vunpack.c.0.s8 %v471
        %v473 = vperm.slane %v469, %v472
        %v474 = vrot.slane %v473, 4
        %v475 = vsel %vm274, 0, %v474
        %v478 = vpack.i.b16 %v473, %v454
        %v479 = vshrl.u32 %v454, 16
        %v480 = vshrl.u32 %v473, 16
        %v481 = vpack.i.b16 %v480, %v479
        %v484 = vpack.i.b16 %v475, %v456
        %v485 = vshrl.u32 %v456, 16
        %v486 = vshrl.u32 %v475, 16
        %v487 = vpack.i.b16 %v486, %v485
        %v488 = vrot.slane %v243, 4
        %v489 = vrot.slane %v246, 4
        %v490 = vrot.slane %v248, 4
        %v491 = vrot.slane %v250, 4
        %v494 = vpack.i.b16 %v489, %v488
        %v495 = vshrl.u32 %v488, 16
        %v496 = vshrl.u32 %v489, 16
        %v497 = vpack.i.b16 %v496, %v495
        %v500 = vpack.i.b16 %v491, %v490
        %v501 = vshrl.u32 %v490, 16
        %v502 = vshrl.u32 %v491, 16
        %v503 = vpack.i.b16 %v502, %v501
        %v506 = vunpack.c.l.s4 1983009808
        %v507 = vunpack.c.0.s8 %v506
        %v508 = vperm.slane %v494, %v507
        %v511 = vunpack.c.l.s4 1983009808
        %v512 = vunpack.c.0.s8 %v511
        %v513 = vperm.slane %v500, %v512
        %v514 = vrot.slane %v513, 4
        %v515 = vsel %vm274, %v514, %v508
        %v516 = vrot.slane %v508, 4
        %v517 = vsel %vm274, %v513, %v516
        %v519 = vunpack.c.l.s4 1934713408
        %v520 = vunpack.c.0.s8 %v519
        %v521 = vperm.slane %v515, %v520
        %v523 = vunpack.c.l.s4 1934713408
        %v524 = vunpack.c.0.s8 %v523
        %v525 = vperm.slane %v517, %v524
        %v526 = vrot.slane %v521, 4
        %v527 = vsel %vm274, 0, %v526
        %v528 = vrot.slane %v525, 4
        %v529 = vsel %vm274, 0, %v528
        %v532 = vunpack.c.l.s4 1983009808
        %v533 = vunpack.c.0.s8 %v532
        %v534 = vperm.slane %v497, %v533
        %v537 = vunpack.c.l.s4 1983009808
        %v538 = vunpack.c.0.s8 %v537
        %v539 = vperm.slane %v503, %v538
        %v540 = vrot.slane %v539, 4
        %v541 = vsel %vm274, %v540, %v534
        %v542 = vrot.slane %v534, 4
        %v543 = vsel %vm274, %v539, %v542
        %v545 = vunpack.c.l.s4 1934713408
        %v546 = vunpack.c.0.s8 %v545
        %v547 = vperm.slane %v541, %v546
        %v549 = vunpack.c.l.s4 1934713408
        %v550 = vunpack.c.0.s8 %v549
        %v551 = vperm.slane %v543, %v550
        %v552 = vrot.slane %v547, 4
        %v553 = vsel %vm274, 0, %v552
        %v554 = vrot.slane %v551, 4
        %v555 = vsel %vm274, 0, %v554
        %v556 = vsel %vm274, %v528, %v521
        %v558 = vunpack.c.l.s4 1983009808
        %v559 = vunpack.c.0.s8 %v558
        %v560 = vperm.slane %v556, %v559
        %v561 = vrot.slane %v529, 4
        %v562 = vsel %vm274, %v561, %v527
        %v564 = vunpack.c.l.s4 1983009808
        %v565 = vunpack.c.0.s8 %v564
        %v566 = vperm.slane %v562, %v565
        %v567 = vrot.slane %v566, 4
        %v568 = vsel %vm274, %v567, %v560
        %v570 = vunpack.c.l.s4 1934713408
        %v571 = vunpack.c.0.s8 %v570
        %v572 = vperm.slane %v568, %v571
        %v573 = vrot.slane %v572, 4
        %v574 = vsel %vm274, 0, %v573
        %v575 = vsel %vm274, %v554, %v547
        %v577 = vunpack.c.l.s4 1983009808
        %v578 = vunpack.c.0.s8 %v577
        %v579 = vperm.slane %v575, %v578
        %v580 = vrot.slane %v555, 4
        %v581 = vsel %vm274, %v580, %v553
        %v583 = vunpack.c.l.s4 1983009808
        %v584 = vunpack.c.0.s8 %v583
        %v585 = vperm.slane %v581, %v584
        %v586 = vrot.slane %v585, 4
        %v587 = vsel %vm274, %v586, %v579
        %v589 = vunpack.c.l.s4 1934713408
        %v590 = vunpack.c.0.s8 %v589
        %v591 = vperm.slane %v587, %v590
        %v592 = vrot.slane %v591, 4
        %v593 = vsel %vm274, 0, %v592
        %v596 = vpack.i.b16 %v591, %v572
        %v597 = vshrl.u32 %v572, 16
        %v598 = vshrl.u32 %v591, 16
        %v599 = vpack.i.b16 %v598, %v597
        %v602 = vpack.i.b16 %v593, %v574
        %v603 = vshrl.u32 %v574, 16
        %v604 = vshrl.u32 %v593, 16
        %v605 = vpack.i.b16 %v604, %v603
        %vm606 = vcmask 130048
        %v608 = vsel %vm606, %v356, 0
        %v611 = vsel %vm606, %v478, 0
        %613 = vmatpush.bf16.xpose.msra.mxu0 0
        %614 = vmatpush.bf16.xpose.msra.mxu0 0
        %615 = vmatpush.bf16.xpose.msra.mxu0 0
        %616 = vmatpush.bf16.xpose.msra.mxu0 0
        %617 = vmatpush.bf16.xpose.msra.mxu0 0
        %618 = vmatpush.bf16.xpose.msra.mxu0 0
        %619 = vmatpush.bf16.xpose.msra.mxu0 0
        %620 = vmatpush.bf16.xpose.msra.mxu0 %v611
        %621 = vmatmul.bf16.gmra.mxu0 %v608
        %v622 = vpop.f32.mrf.mxu0
        %v623 = vadd.f32 0.0, %v622
        %v624 = vpop.f32.mrf.mxu0
        %625 = vdwg.mxu0
        %v627 = vsel %vm606, %v359, 0
        %v630 = vsel %vm606, %v481, 0
        %632 = vmatpush.bf16.xpose.msra.mxu0 0
        %633 = vmatpush.bf16.xpose.msra.mxu0 0
        %634 = vmatpush.bf16.xpose.msra.mxu0 0
        %635 = vmatpush.bf16.xpose.msra.mxu0 0
        %636 = vmatpush.bf16.xpose.msra.mxu0 0
        %637 = vmatpush.bf16.xpose.msra.mxu0 0
        %638 = vmatpush.bf16.xpose.msra.mxu0 0
        %639 = vmatpush.bf16.xpose.msra.mxu0 %v630
        %640 = vmatmul.bf16.gmra.mxu0 %v627
        %v641 = vpop.f32.mrf.mxu0
        %v642 = vadd.f32 0.0, %v641
        %v643 = vpop.f32.mrf.mxu0
        %644 = vdwg.mxu0
        %v646 = vsel %vm606, %v362, 0
        %v649 = vsel %vm606, %v484, 0
        %651 = vmatpush.bf16.xpose.msra.mxu0 0
        %652 = vmatpush.bf16.xpose.msra.mxu0 0
        %653 = vmatpush.bf16.xpose.msra.mxu0 0
        %654 = vmatpush.bf16.xpose.msra.mxu0 0
        %655 = vmatpush.bf16.xpose.msra.mxu0 0
        %656 = vmatpush.bf16.xpose.msra.mxu0 0
        %657 = vmatpush.bf16.xpose.msra.mxu0 0
        %658 = vmatpush.bf16.xpose.msra.mxu0 %v649
        %659 = vmatmul.bf16.gmra.mxu0 %v646
        %v660 = vpop.f32.mrf.mxu0
        %v661 = vadd.f32 0.0, %v660
        %v662 = vpop.f32.mrf.mxu0
        %663 = vdwg.mxu0
        %v665 = vsel %vm606, %v365, 0
        %v668 = vsel %vm606, %v487, 0
        %670 = vmatpush.bf16.xpose.msra.mxu0 0
        %671 = vmatpush.bf16.xpose.msra.mxu0 0
        %672 = vmatpush.bf16.xpose.msra.mxu0 0
        %673 = vmatpush.bf16.xpose.msra.mxu0 0
        %674 = vmatpush.bf16.xpose.msra.mxu0 0
        %675 = vmatpush.bf16.xpose.msra.mxu0 0
        %676 = vmatpush.bf16.xpose.msra.mxu0 0
        %677 = vmatpush.bf16.xpose.msra.mxu0 %v668
        %678 = vmatmul.bf16.gmra.mxu0 %v665
        %v679 = vpop.f32.mrf.mxu0
        %v680 = vadd.f32 0.0, %v679
        %v681 = vpop.f32.mrf.mxu0
        %682 = vdwg.mxu0
        %vm683 = vcmask 64512
        %v684 = vsel %vm683, %v623, -inf
        %685 = vmax.xlane.f32.xlu0 %v684
        %v686 = vpop.xlane.xlu0 %685
        %v687 = vsel %vm683, %v642, -inf
        %688 = vmax.xlane.f32.xlu0 %v687
        %v689 = vpop.xlane.xlu0 %688
        %v690 = vsel %vm683, %v661, -inf
        %691 = vmax.xlane.f32.xlu0 %v690
        %v692 = vpop.xlane.xlu0 %691
        %v693 = vsel %vm683, %v680, -inf
        %694 = vmax.xlane.f32.xlu0 %v693
        %v695 = vpop.xlane.xlu0 %694
        %v696 = vsub.f32 %v623, %v686
        %v697 = vsub.f32 %v642, %v689
        %v698 = vsub.f32 %v661, %v692
        %v699 = vsub.f32 %v680, %v695
        %v700 = vmul.f32 %v696, 1.442695
        %v701 = vpow.pop %v700
        %v702 = vmul.f32 %v697, 1.442695
        %v703 = vpow.pop %v702
        %v704 = vmul.f32 %v698, 1.442695
        %v705 = vpow.pop %v704
        %v706 = vmul.f32 %v699, 1.442695
        %v707 = vpow.pop %v706
        %v708 = vsel %vm683, %v701, 0.0
        %709 = vadd.xlane.f32.xlu0 %v708
        %v710 = vpop.xlane.xlu0 %709
        %v711 = vsel %vm683, %v703, 0.0
        %712 = vadd.xlane.f32.xlu0 %v711
        %v713 = vpop.xlane.xlu0 %712
        %v714 = vsel %vm683, %v705, 0.0
        %715 = vadd.xlane.f32.xlu0 %v714
        %v716 = vpop.xlane.xlu0 %715
        %v717 = vsel %vm683, %v707, 0.0
        %718 = vadd.xlane.f32.xlu0 %v717
        %v719 = vpop.xlane.xlu0 %718
        %v720 = vrcp.pop %v710
        %v721 = vrcp.pop %v713
        %v722 = vrcp.pop %v716
        %v723 = vrcp.pop %v719
        %v724 = vmul.f32 %v701, %v720
        %v725 = vmul.f32 %v703, %v721
        %v726 = vmul.f32 %v705, %v722
        %v727 = vmul.f32 %v707, %v723
        %v728 = vpack.c.bf16 %v724, %v724
        %v729 = vpack.c.bf16 %v725, %v725
        %v730 = vpack.c.bf16 %v726, %v726
        %v731 = vpack.c.bf16 %v727, %v727
        %v733 = vsel %vm683, %v728, 0
        %vm735 = vcmask 1043456
        %v737 = vsel %vm735, %v596, 0
        %739 = vmatpush.bf16.msra.mxu0 0
        %740 = vmatpush.bf16.msra.mxu0 0
        %741 = vmatpush.bf16.msra.mxu0 0
        %742 = vmatpush.bf16.msra.mxu0 0
        %743 = vmatpush.bf16.msra.mxu0 0
        %744 = vmatpush.bf16.msra.mxu0 0
        %745 = vmatpush.bf16.msra.mxu0 0
        %746 = vmatpush.bf16.msra.mxu0 %v737
        %747 = vmatmul.bf16.gmra.mxu0 %v733
        %v748 = vpop.f32.mrf.mxu0
        %v749 = vadd.f32 0.0, %v748
        %v750 = vpop.f32.mrf.mxu0
        %751 = vdwg.mxu0
        %v753 = vsel %vm683, %v729, 0
        %v756 = vsel %vm735, %v599, 0
        %758 = vmatpush.bf16.msra.mxu0 0
        %759 = vmatpush.bf16.msra.mxu0 0
        %760 = vmatpush.bf16.msra.mxu0 0
        %761 = vmatpush.bf16.msra.mxu0 0
        %762 = vmatpush.bf16.msra.mxu0 0
        %763 = vmatpush.bf16.msra.mxu0 0
        %764 = vmatpush.bf16.msra.mxu0 0
        %765 = vmatpush.bf16.msra.mxu0 %v756
        %766 = vmatmul.bf16.gmra.mxu0 %v753
        %v767 = vpop.f32.mrf.mxu0
        %v768 = vadd.f32 0.0, %v767
        %v769 = vpop.f32.mrf.mxu0
        %770 = vdwg.mxu0
        %v772 = vsel %vm683, %v730, 0
        %v775 = vsel %vm735, %v602, 0
        %777 = vmatpush.bf16.msra.mxu0 0
        %778 = vmatpush.bf16.msra.mxu0 0
        %779 = vmatpush.bf16.msra.mxu0 0
        %780 = vmatpush.bf16.msra.mxu0 0
        %781 = vmatpush.bf16.msra.mxu0 0
        %782 = vmatpush.bf16.msra.mxu0 0
        %783 = vmatpush.bf16.msra.mxu0 0
        %784 = vmatpush.bf16.msra.mxu0 %v775
        %785 = vmatmul.bf16.gmra.mxu0 %v772
        %v786 = vpop.f32.mrf.mxu0
        %v787 = vadd.f32 0.0, %v786
        %v788 = vpop.f32.mrf.mxu0
        %789 = vdwg.mxu0
        %v791 = vsel %vm683, %v731, 0
        %v794 = vsel %vm735, %v605, 0
        %796 = vmatpush.bf16.msra.mxu0 0
        %797 = vmatpush.bf16.msra.mxu0 0
        %798 = vmatpush.bf16.msra.mxu0 0
        %799 = vmatpush.bf16.msra.mxu0 0
        %800 = vmatpush.bf16.msra.mxu0 0
        %801 = vmatpush.bf16.msra.mxu0 0
        %802 = vmatpush.bf16.msra.mxu0 0
        %803 = vmatpush.bf16.msra.mxu0 %v794
        %804 = vmatmul.bf16.gmra.mxu0 %v791
        %v805 = vpop.f32.mrf.mxu0
        %v806 = vadd.f32 0.0, %v805
        %v807 = vpop.f32.mrf.mxu0
        %808 = vdwg.mxu0
        %v809 = vrot.slane %v787, 4
        %vm810 = vcmask 1047556
        %v811 = vsel %vm810, %v809, %v749
        %v812 = vrot.slane %v749, 4
        %v813 = vsel %vm810, %v787, %v812
        %v815 = vunpack.c.l.s4 1983009808
        %v816 = vunpack.c.0.s8 %v815
        %v817 = vperm.slane %v811, %v816
        %v819 = vunpack.c.l.s4 1983009808
        %v820 = vunpack.c.0.s8 %v819
        %v821 = vperm.slane %v813, %v820
        %v822 = vrot.slane %v806, 4
        %v823 = vsel %vm810, %v822, %v768
        %v824 = vrot.slane %v768, 4
        %v825 = vsel %vm810, %v806, %v824
        %v827 = vunpack.c.l.s4 1983009808
        %v828 = vunpack.c.0.s8 %v827
        %v829 = vperm.slane %v823, %v828
        %v831 = vunpack.c.l.s4 1983009808
        %v832 = vunpack.c.0.s8 %v831
        %v833 = vperm.slane %v825, %v832
        %v834 = vrot.slane %v829, 4
        %v835 = vsel %vm810, %v834, %v817
        %v836 = vrot.slane %v817, 4
        %v837 = vsel %vm810, %v829, %v836
        %v839 = vunpack.c.l.s4 1934713408
        %v840 = vunpack.c.0.s8 %v839
        %v841 = vperm.slane %v835, %v840
        %v843 = vunpack.c.l.s4 1934713408
        %v844 = vunpack.c.0.s8 %v843
        %v845 = vperm.slane %v837, %v844
        %v846 = vrot.slane %v833, 4
        %v847 = vsel %vm810, %v846, %v821
        %v848 = vrot.slane %v821, 4
        %v849 = vsel %vm810, %v833, %v848
        %v851 = vunpack.c.l.s4 1934713408
        %v852 = vunpack.c.0.s8 %v851
        %v853 = vperm.slane %v847, %v852
        %v855 = vunpack.c.l.s4 1934713408
        %v856 = vunpack.c.0.s8 %v855
        %v857 = vperm.slane %v849, %v856
        %v858 = vrot.slane %v841, 4
        %v859 = vsel %vm810, 0.0, %v858
        %v860 = vrot.slane %v845, 4
        %v861 = vsel %vm810, 0.0, %v860
        %v862 = vrot.slane %v853, 4
        %v863 = vsel %vm810, 0.0, %v862
        %v864 = vrot.slane %v857, 4
        %v865 = vsel %vm810, 0.0, %v864
        %v866 = vsel %vm810, %v860, %v841
        %v868 = vunpack.c.l.s4 1983009808
        %v869 = vunpack.c.0.s8 %v868
        %v870 = vperm.slane %v866, %v869
        %v871 = vrot.slane %v861, 4
        %v872 = vsel %vm810, %v871, %v859
        %v874 = vunpack.c.l.s4 1983009808
        %v875 = vunpack.c.0.s8 %v874
        %v876 = vperm.slane %v872, %v875
        %v877 = vsel %vm810, %v864, %v853
        %v879 = vunpack.c.l.s4 1983009808
        %v880 = vunpack.c.0.s8 %v879
        %v881 = vperm.slane %v877, %v880
        %v882 = vrot.slane %v865, 4
        %v883 = vsel %vm810, %v882, %v863
        %v885 = vunpack.c.l.s4 1983009808
        %v886 = vunpack.c.0.s8 %v885
        %v887 = vperm.slane %v883, %v886
        %v888 = vrot.slane %v876, 4
        %v889 = vsel %vm810, %v888, %v870
        %v890 = vrot.slane %v870, 4
        %v891 = vsel %vm810, %v876, %v890
        %v893 = vunpack.c.l.s4 1934713408
        %v894 = vunpack.c.0.s8 %v893
        %v895 = vperm.slane %v889, %v894
        %v897 = vunpack.c.l.s4 1934713408
        %v898 = vunpack.c.0.s8 %v897
        %v899 = vperm.slane %v891, %v898
        %v900 = vrot.slane %v887, 4
        %v901 = vsel %vm810, %v900, %v881
        %v902 = vrot.slane %v881, 4
        %v903 = vsel %vm810, %v887, %v902
        %v905 = vunpack.c.l.s4 1934713408
        %v906 = vunpack.c.0.s8 %v905
        %v907 = vperm.slane %v901, %v906
        %v909 = vunpack.c.l.s4 1934713408
        %v910 = vunpack.c.0.s8 %v909
        %v911 = vperm.slane %v903, %v910
        %v912 = vrot.slane %v907, 4
        %v913 = vsel %vm810, %v912, %v895
        %v914 = vrot.slane %v895, 4
        %v915 = vsel %vm810, %v907, %v914
        %v916 = vrot.slane %v911, 4
        %v917 = vsel %vm810, %v916, %v899
        %v918 = vrot.slane %v899, 4
        %v919 = vsel %vm810, %v911, %v918
        %921 = vrot.lane.b32.xlu0 %v915, 16
        %v922 = vpop.permute.xlu0 %921
        %925 = vrot.lane.b32.xlu0 %v917, 32
        %v926 = vpop.permute.xlu0 %925
        %929 = vrot.lane.b32.xlu0 %v919, 48
        %v930 = vpop.permute.xlu0 %929
        %v932 = vsel %vm606, %v913, %v922
        %vm933 = vcmask 261120
        %v934 = vsel %vm933, %v932, %v926
        %vm935 = vcmask 392192
        %v936 = vsel %vm935, %v934, %v930
        %v937 = vpack.c.bf16 %v936, %v936
        %v938 = vld [vmem:[%s1] sm:$0xf]
        %v939 = vld [vmem:[%s1 + $0x4] sm:$0xf]
        %v940 = vld [vmem:[%s1 + $0x8] sm:$0xf]
        %v941 = vld [vmem:[%s1 + $0xc] sm:$0xf]
        %v942 = vld [vmem:[%s1 + $0x10] sm:$0xf]
        %v943 = vld [vmem:[%s1 + $0x14] sm:$0xf]
        %v944 = vld [vmem:[%s1 + $0x18] sm:$0xf]
        %v945 = vld [vmem:[%s1 + $0x1c] sm:$0xf]
        %v946 = vld [vmem:[%s2] sm:$0x1]
        %v948 = vperm.slane %v946, 0
        %v958 = vunpack.c.l.b16 %v938
        %v959 = vunpack.c.l.b16 %v939
        %v960 = vunpack.c.l.b16 %v940
        %v961 = vunpack.c.l.b16 %v941
        %v962 = vunpack.c.l.b16 %v942
        %v963 = vunpack.c.l.b16 %v943
        %v964 = vunpack.c.l.b16 %v944
        %v965 = vunpack.c.l.b16 %v945
        %v966 = vpack.c.b16 %v959, %v958
        %v967 = vpack.c.b16 %v961, %v960
        %v968 = vpack.c.b16 %v963, %v962
        %v969 = vpack.c.b16 %v965, %v964
        %vm974 = vcmask 523264
        %v976 = vsel %vm974, %v937, 0
        %978 = vmatpush.bf16.msra.mxu0 0
        %979 = vmatpush.bf16.msra.mxu0 0
        %980 = vmatpush.bf16.msra.mxu0 0
        %981 = vmatpush.bf16.msra.mxu0 0
        %982 = vmatpush.bf16.msra.mxu0 %v969
        %983 = vmatpush.bf16.msra.mxu0 %v968
        %984 = vmatpush.bf16.msra.mxu0 %v967
        %985 = vmatpush.bf16.msra.mxu0 %v966
        %986 = vmatmul.bf16.gmra.mxu0 %v976
        %v987 = vpop.f32.mrf.mxu0
        %v988 = vadd.f32 %v948, %v987
        %v989 = vpop.f32.mrf.mxu0
        %990 = vdwg.mxu0
        %v991 = vrot.slane %v367, 4
        %v993 = vunpack.c.l.bf16 %v991
        %v994 = vxor.u32 %v993, 2147483648
        %v995 = vmul.f32 %v994, 1.442695
        %v996 = vpow.pop %v995
        %v997 = vadd.f32 %v996, 1.0
        %v998 = vrcp.pop %v997
        %v999 = vmul.f32 %v997, %v998
        %v1000 = vsub.f32 1.0, %v999
        %v1001 = vmul.f32 %v998, %v1000
        %v1002 = vadd.f32 %v998, %v1001
        %vm1003 = vweird.f32 %v997
        %vm1004 = vweird.f32 %v998
        %vm1005 = vmor %vm1003, %vm1004
        %v1006 = vsel %vm1005, %v998, %v1002
        %v1007 = vand.u32 2147483647, %v997
        %vm1008 = vcmp.eq.f32.partialorder %v1007, 8.507059e+37
        %v1009 = vand.u32 %v997, 2147483648
        %v1010 = vor.u32 1.1754944e-38, %v1009
        %v1011 = vsel %vm1008, %v1010, %v1006
        %v1012 = vmul.f32 1.0, %v1011
        %v1013 = vadd.f32 %v1012, 2.0
        %1015 = vrot.lane.b32.xlu0 %v1012, 1
        %v1016 = vpop.permute.xlu0 %1015
        %v1018 = vsub.f32 %v1013, %v1016
        %1020 = vset.pattern.permute.xlu0 1
        %1021 = vperm.xlu0 %1020, %v1018
        %v1022 = vpop.permute.xlu0 %1021
        %v1024 = vmul.f32 %v988, %v1022
        %v1025 = vpack.c.bf16 %v1024, %v1024
        %v1026 = vld [vmem:[#allocation2] sm:$0xf]
        %v1027 = vld [vmem:[#allocation2 + $0x4] sm:$0xf]
        %v1028 = vld [vmem:[#allocation2 + $0x8] sm:$0xf]
        %v1029 = vld [vmem:[#allocation2 + $0xc] sm:$0xf]
        %v1030 = vld [vmem:[#allocation2 + $0x10] sm:$0xf]
        %v1031 = vld [vmem:[#allocation2 + $0x14] sm:$0xf]
        %v1032 = vld [vmem:[#allocation2 + $0x18] sm:$0xf]
        %v1033 = vld [vmem:[#allocation2 + $0x1c] sm:$0xf]
        %v1034 = vld [vmem:[%s4] sm:$0x1]
        %v1036 = vperm.slane %v1034, 0
        %v1046 = vunpack.c.l.b16 %v1026
        %v1047 = vunpack.c.l.b16 %v1027
        %v1048 = vunpack.c.l.b16 %v1028
        %v1049 = vunpack.c.l.b16 %v1029
        %v1050 = vunpack.c.l.b16 %v1030
        %v1051 = vunpack.c.l.b16 %v1031
        %v1052 = vunpack.c.l.b16 %v1032
        %v1053 = vunpack.c.l.b16 %v1033
        %v1054 = vpack.c.b16 %v1047, %v1046
        %v1055 = vpack.c.b16 %v1049, %v1048
        %v1056 = vpack.c.b16 %v1051, %v1050
        %v1057 = vpack.c.b16 %v1053, %v1052
        %v1063 = vsel %vm974, %v1025, 0
        %1065 = vmatpush.bf16.msra.mxu0 0
        %1066 = vmatpush.bf16.msra.mxu0 0
        %1067 = vmatpush.bf16.msra.mxu0 0
        %1068 = vmatpush.bf16.msra.mxu0 0
        %1069 = vmatpush.bf16.msra.mxu0 %v1057
        %1070 = vmatpush.bf16.msra.mxu0 %v1056
        %1071 = vmatpush.bf16.msra.mxu0 %v1055
        %1072 = vmatpush.bf16.msra.mxu0 %v1054
        %1073 = vmatmul.bf16.gmra.mxu0 %v1063
        %v1074 = vpop.f32.mrf.mxu0
        %v1075 = vadd.f32 %v1036, %v1074
        %v1076 = vpop.f32.mrf.mxu0
        %1077 = vdwg.mxu0
        %v1078 = vmax.f32 %v1075, 0.0
        %1079 = vst [vmem:[%s241] sm:$0xff] %v1078
        %p1080 = scmp.lt.s32.totalorder %s17, 1
        %s1081 = scalar_select %p1080, %s17, 1
        %s1082 = smul.addr %s1081, 8
        %s1083 = scalar_lea.vmem %s5, %s1082
        // Predicated region
        $region45: #{moyu_attn_layer.3} parent=39 // pred_check
          %p1084 = pneg %p145
        $region46: #{moyu_attn_layer.3} parent=39 // pred_check_branch
          %1086 = sbr.rel (%p1084) target = $region48
        $region47: #{moyu_attn_layer.3} parent=39 // pred_region
          _
        $region48: #{moyu_attn_layer.3} parent=39 // pred_fallthru
          _
      $region40: #{moyu_attn_layer.3} parent=5 // pred_fallthru
        _
      %p1087 = scmp.le.s32.totalorder 2, %s12
      // Predicated region
      $region49: #{moyu_attn_layer.3} parent=5 // pred_check
        %p1088 = pneg %p1087
      $region50: #{moyu_attn_layer.3} parent=5 // pred_check_branch
        %1090 = sbr.rel (%p1088) target = $region52
      $region51: #{moyu_attn_layer.3} parent=5 // pred_region
        %s1091 = ssub.s32 %s12, 2
        // Predicated region
        $region53: #{moyu_attn_layer.3} parent=51 // pred_check
          %p1092 = pneg %p151
        $region54: #{moyu_attn_layer.3} parent=51 // pred_check_branch
          %1094 = sbr.rel (%p1092) target = $region56
        $region55: #{moyu_attn_layer.3} parent=51 // pred_region
          %p1095 = scmp.lt.s32.totalorder %s18, 1
          %s1096 = scalar_select %p1095, %s18, 1
          %s1097 = smul.addr %s1096, 8
          %s1098 = scalar_lea.vmem %s5, %s1097
        $region56: #{moyu_attn_layer.3} parent=51 // pred_fallthru
          _
      $region52: #{moyu_attn_layer.3} parent=5 // pred_fallthru
        _
    $region6: #{moyu_attn_layer.3} parent=1 // loop_footer
      %s16 = sadd.s32 1, %s12
    $region7: #{moyu_attn_layer.3} parent=1 // loop_footer_branch
      %11 = sbr.rel target = $region3
    $region8: #{moyu_attn_layer.3} parent=1 // loop_exit
      _
    %1099 = vsyncpa [#allocation3], 1
    %s1100 = scalar_lea.sflag [#allocation3], 1
    %1101 = vsyncpa %s1100, 1

</llo_original>
